<compile_context>
chip_gen: v7x
topology: tpu7x:2x2x1
jax: 0.10.0
libtpu: 0.0.40
codegen_flags: <defaults>
</compile_context>

<pallas_src>
import functools

import jax
import jax.numpy as jnp
import numpy as np
from jax import lax
from jax.experimental import pallas as pl
from jax.experimental.pallas import tpu as pltpu

EPS = 1e-8
LOG_2PI = 1.8378770664093453   # log(2*pi)
INV_SQRT2 = 0.7071067811865476
SUBLANE = 8


def _round_up(x, m):
    return ((x + m - 1) // m) * m


def _choose_btile(B):
    # Amortize the serial per-step latency over more lanes, but keep >= 2 grid steps
    # when the batch allows so v7x's two TensorCores are both used.
    if B <= 256:
        return 128
    if B <= 1024:
        return 256
    return 512


def _tpp_fused_kernel(times_ref, mask_ref, waug_ref, out_ref,
                      haug_ref, enc_ref, lenc_ref, mu_ref, ls_ref, *, hidden_pad):
    """Fused TPP log-likelihood for one batch tile (batch on lanes).

    Refs:
      times_ref : (T_pad, Bt)   raw inter-event times
      mask_ref  : (T_pad, Bt)   validity mask as float 0/1
      waug_ref  : (OutP, Kp)    augmented weight [[W_hh|w_t|w_lt|b_rnn],[w_lin|0|0|b_lin]]
      out_ref   : (1, Bt)       per-batch-lane log-likelihood
      haug_ref  : (Kp, Bt)      augmented state scratch [h ; e_t ; l_t ; 1 ; pad]
      enc_ref   : (T_pad, Bt)   precomputed t+eps
      lenc_ref  : (T_pad, Bt)   precomputed log(t+eps)
      mu_ref    : (T_pad, Bt)   mu_t   (from h_{t-1})
      ls_ref    : (T_pad, Bt)   log_sigma_t
    """
    Tp, Bt = times_ref.shape
    Hp = hidden_pad

    # ---- Phase 0: vectorized clamp + encode (keeps exp/log off the serial path) ----
    tt = jnp.maximum(times_ref[...], EPS)          # torch.clamp(times, min=eps)
    enc_ref[...] = tt + EPS                        # encode() adds eps again
    lenc_ref[...] = jnp.log(tt + EPS)

    # Augmented state: rows [0,Hp) hold h (init 0), row Hp = e_t, Hp+1 = l_t, Hp+2 = 1.
    haug_ref[...] = jnp.zeros_like(haug_ref)
    haug_ref[Hp + 2:Hp + 3, :] = jnp.ones((1, Bt), jnp.float32)

    waug = waug_ref[...]                           # tiny (OutP, Kp) weight, vreg-resident

    # ---- Phase 1: serial recurrence; one MXU pass per step emits h_t AND mu/log_sigma ----
    def step_body(t):
        haug_ref[Hp:Hp + 1, :] = enc_ref[pl.ds(t, 1), :]
        haug_ref[Hp + 1:Hp + 2, :] = lenc_ref[pl.ds(t, 1), :]
        res = jnp.dot(waug, haug_ref[...], preferred_element_type=jnp.float32)  # (OutP, Bt)
        mu_ref[pl.ds(t, 1), :] = res[Hp:Hp + 1, :]          # from h_{t-1}  (shifted history)
        ls_ref[pl.ds(t, 1), :] = res[Hp + 1:Hp + 2, :]
        haug_ref[0:Hp, :] = jnp.tanh(res[0:Hp, :])          # h_t

    if Tp <= 64:
        # Static Python unroll: static store indices; state lives in VMEM refs so the
        # unroll does not blow up vreg live ranges.
        for t in range(Tp):
            step_body(t)
    else:
        # Bounded unroll for long sequences to avoid a spill-bound regime.
        def _step(t, carry):
            step_body(t)
            return carry
        lax.fori_loop(0, Tp, _step, 0, unroll=8)

    # ---- Phase 2: batched LogNormal terms + masked reduction over all steps ----
    mu = mu_ref[...]
    log_sigma = ls_ref[...]
    lt = jnp.log(jnp.maximum(times_ref[...], EPS))          # log of clamped times (no extra eps)
    z = (lt - mu) * jnp.exp(-log_sigma)
    log_prob = -lt - log_sigma - 0.5 * LOG_2PI - 0.5 * z * z
    cdf = 0.5 * (1.0 + lax.erf(z * INV_SQRT2))
    # Matches torch's log(1 - cdf); can reach -inf for extreme z, same as the reference.
    # TODO(synk): switch to log(0.5) + log(erfc(z/sqrt(2))) if a stable tail is required.
    log_surv = jnp.log(1.0 - cdf)

    m = mask_ref[...]
    valid = m > 0.0
    idx = lax.broadcasted_iota(jnp.int32, (Tp, Bt), 0)
    last = jnp.max(jnp.where(valid, idx, -1), axis=0, keepdims=True)   # (1, Bt)
    is_last = (idx == last) & valid

    # density at masked non-last steps, survival at the last valid step
    contrib = jnp.where(is_last, log_surv, jnp.where(valid, log_prob, 0.0))
    out_ref[...] = jnp.sum(contrib, axis=0, keepdims=True)             # (1, Bt)


@jax.jit
def neural_tpp_log_likelihood(times, mask, params):
    """times: (B, T) float32, mask: (B, T) bool -> (B,) float32 log-likelihood."""
    B, T = times.shape
    w_ih, b_ih, w_hh, b_hh, w_lin, b_lin = (
        params["w_ih"], params["b_ih"], params["w_hh"], params["b_hh"],
        params["w_lin"], params["b_lin"])
    H = w_hh.shape[0]

    Hp = _round_up(H, SUBLANE)
    Kp = _round_up(Hp + 3, SUBLANE)        # [h ; e ; l ; 1] + pad
    OutP = _round_up(Hp + 2, SUBLANE)      # [h_new ; mu ; log_sigma] + pad
    T_pad = _round_up(T, SUBLANE)

    btile = _choose_btile(B)
    B_pad = _round_up(B, btile)
    nb = B_pad // btile

    def pad2(x, r, c):
        x = x.astype(jnp.float32)
        return jnp.zeros((r, c), jnp.float32).at[:x.shape[0], :x.shape[1]].set(x)

    # Augmented weight.  Padded hidden rows stay zero -> their state stays tanh(0)=0.
    w_aug = jnp.zeros((OutP, Kp), jnp.float32)
    w_aug = w_aug.at[:H, :H].set(w_hh.astype(jnp.float32))
    w_aug = w_aug.at[:H, Hp].set(w_ih[:, 0].astype(jnp.float32))           # column for t+eps
    w_aug = w_aug.at[:H, Hp + 1].set(w_ih[:, 1].astype(jnp.float32))       # column for log(t+eps)
    w_aug = w_aug.at[:H, Hp + 2].set((b_ih + b_hh).astype(jnp.float32))    # fused RNN bias
    w_aug = w_aug.at[Hp, :H].set(w_lin[0].astype(jnp.float32))             # mu row
    w_aug = w_aug.at[Hp + 1, :H].set(w_lin[1].astype(jnp.float32))         # log_sigma row
    w_aug = w_aug.at[Hp, Hp + 2].set(b_lin[0].astype(jnp.float32))
    w_aug = w_aug.at[Hp + 1, Hp + 2].set(b_lin[1].astype(jnp.float32))

    # Time-major, lane-dense layout: (T_pad, B_pad) with batch on lanes.
    times_tb = pad2(times.T, T_pad, B_pad)
    mask_tb = pad2(mask.T, T_pad, B_pad)

    kernel = functools.partial(_tpp_fused_kernel, hidden_pad=Hp)
    bspec = lambda rows: pl.BlockSpec((rows, btile), lambda b: (0, b))

    # Explicit scoped-VMEM budget (f32 words): pipelined inputs double-buffered + scratch.
    vmem_words = (2 * 2 * T_pad * btile        # times + mask, 2-deep
                  + 2 * OutP * Kp              # augmented weight
                  + 2 * btile                  # output
                  + Kp * btile                 # h_aug scratch
                  + 4 * T_pad * btile)         # enc / lenc / mu / log_sigma scratch
    vmem_limit = int(min(32 << 20, max(16 << 20, 4 * 4 * vmem_words)))

    out = pl.pallas_call(
        kernel,
        out_shape=jax.ShapeDtypeStruct((1, B_pad), jnp.float32),
        grid_spec=pltpu.PrefetchScalarGridSpec(
            num_scalar_prefetch=0,
            grid=(nb,),                                   # batch tiles only; T loop is in-kernel
            in_specs=[
                bspec(T_pad),                             # times
                bspec(T_pad),                             # mask
                pl.BlockSpec((OutP, Kp), lambda b: (0, 0)),   # augmented weight (tiny, constant)
            ],
            out_specs=pl.BlockSpec((1, btile), lambda b: (0, b)),
            scratch_shapes=[
                pltpu.VMEM((Kp, btile), jnp.float32),     # augmented state [h ; e ; l ; 1]
                pltpu.VMEM((T_pad, btile), jnp.float32),  # t + eps
                pltpu.VMEM((T_pad, btile), jnp.float32),  # log(t + eps)
                pltpu.VMEM((T_pad, btile), jnp.float32),  # mu
                pltpu.VMEM((T_pad, btile), jnp.float32),  # log_sigma
            ],
        ),
        compiler_params=pltpu.CompilerParams(
            dimension_semantics=("parallel",),            # batch tiles independent (v7x 2 TCs)
            vmem_limit_bytes=vmem_limit,
        ),
    )(times_tb, mask_tb, w_aug)
    return out[0, :B]


def neural_tpp_reference(times, mask, params):
    """Pure-JAX reference mirroring the PyTorch module (for validation)."""
    w_ih, b_ih, w_hh, b_hh, w_lin, b_lin = (
        params["w_ih"], params["b_ih"], params["w_hh"], params["b_hh"],
        params["w_lin"], params["b_lin"])
    B, T = times.shape
    H = w_hh.shape[0]

    tc = jnp.maximum(times, EPS)
    enc = jnp.stack([tc + EPS, jnp.log(tc + EPS)], axis=-1)        # (B, T, 2)

    def step(h, x_t):                                              # x_t: (B, 2)
        h_new = jnp.tanh(x_t @ w_ih.T + b_ih + h @ w_hh.T + b_hh)
        return h_new, h_new

    h0 = jnp.zeros((B, H), jnp.float32)
    _, hs = lax.scan(step, h0, jnp.swapaxes(enc, 0, 1))            # (T, B, H)
    hs = jnp.swapaxes(hs, 0, 1)                                    # (B, T, H)
    hist = jnp.concatenate([jnp.zeros_like(hs[:, :1]), hs[:, :-1]], axis=1)

    out = hist @ w_lin.T + b_lin                                   # (B, T, 2)
    mu, sigma = out[..., 0], jnp.exp(out[..., 1])

    lt = jnp.log(tc)
    z = (lt - mu) / sigma
    log_prob = -lt - jnp.log(sigma) - 0.5 * LOG_2PI - 0.5 * z * z
    cdf = 0.5 * (1.0 + lax.erf(z * INV_SQRT2))
    surv = 1.0 - cdf

    idx = jnp.arange(T)[None, :]
    last_idx = jnp.max(jnp.where(mask, idx, -1), axis=1, keepdims=True)
    is_last = (idx == last_idx) & mask

    log_density = jnp.sum(jnp.where(mask & ~is_last, log_prob, 0.0), axis=1)
    log_survival = jnp.sum(jnp.where(is_last, jnp.log(surv), 0.0), axis=1)
    return log_density + log_survival


def init_params(key, hidden_dim=16):
    """Deterministic init matching the PyTorch parameter shapes (uniform +-1/sqrt(H))."""
    H = hidden_dim
    k = 1.0 / np.sqrt(H)
    ks = jax.random.split(key, 6)
    u = lambda kk, shape: jax.random.uniform(kk, shape, jnp.float32, minval=-k, maxval=k)
    return {
        "w_ih": u(ks[0], (H, 2)),    # RNN weight_ih_l0
        "b_ih": u(ks[1], (H,)),      # RNN bias_ih_l0
        "w_hh": u(ks[2], (H, H)),    # RNN weight_hh_l0
        "b_hh": u(ks[3], (H,)),      # RNN bias_hh_l0
        "w_lin": u(ks[4], (2, H)),   # Linear weight
        "b_lin": u(ks[5], (2,)),     # Linear bias
    }


if __name__ == "__main__":
    key = jax.random.PRNGKey(0)
    k_par, k_times = jax.random.split(key)

    B, T, H = 4, 8, 16
    params = init_params(k_par, hidden_dim=H)

    times = jax.random.uniform(k_times, (B, T), jnp.float32, minval=0.1, maxval=2.0)
    lengths = jnp.array([8, 5, 6, 3], dtype=jnp.int32)
    mask = jnp.arange(T, dtype=jnp.int32)[None, :] < lengths[:, None]
    # zero out padded positions like a padded batch would
    times = jnp.where(mask, times, 0.0)

    ll = neural_tpp_log_likelihood(times, mask, params)
    ll = jax.block_until_ready(ll)

    ll_ref = jax.block_until_ready(neural_tpp_reference(times, mask, params))
    np.testing.assert_allclose(np.asarray(ll), np.asarray(ll_ref), rtol=1e-3, atol=1e-3)

    print("KERNEL_OK")
</pallas_src>

<mosaic_0001>
module attributes {stable_mosaic.version = 11 : i64} {
  func.func @_tpp_fused_kernel(%arg0: i32, %arg1: memref<8x128xf32, #tpu.memory_space<vmem>>, %arg2: memref<8x128xf32, #tpu.memory_space<vmem>>, %arg3: memref<24x24xf32, #tpu.memory_space<vmem>>, %arg4: memref<1x128xf32, #tpu.memory_space<vmem>>, %arg5: memref<24x128xf32, #tpu.memory_space<vmem>>, %arg6: memref<8x128xf32, #tpu.memory_space<vmem>>, %arg7: memref<8x128xf32, #tpu.memory_space<vmem>>, %arg8: memref<8x128xf32, #tpu.memory_space<vmem>>, %arg9: memref<8x128xf32, #tpu.memory_space<vmem>>) attributes {dimension_semantics = [#tpu.dimension_semantics<parallel>], iteration_bounds = array<i64: 1>, scalar_prefetch = 0 : i64, scratch_operands = 5 : i64, tpu.core_type = #tpu.core_type<tc>, window_params = [{transform_indices = @transform_0, window_bounds = array<i64: 8, 128>}, {transform_indices = @transform_1, window_bounds = array<i64: 8, 128>}, {pipeline_mode = #tpu.pipeline_mode<synchronous>, transform_indices = @transform_2, window_bounds = array<i64: 24, 24>}, {transform_indices = @transform_3, window_bounds = array<i64: 1, 128>}]} {
    %c0 = arith.constant 0 : index
    %c0_0 = arith.constant 0 : index
    %0 = vector.load %arg1[%c0, %c0_0] : memref<8x128xf32, #tpu.memory_space<vmem>>, vector<8x128xf32>
    %cst = arith.constant 9.99999993E-9 : f32
    %1 = vector.broadcast %cst : f32 to vector<8x128xf32>
    %2 = arith.maximumf %0, %1 : vector<8x128xf32>
    %cst_1 = arith.constant 9.99999993E-9 : f32
    %3 = vector.broadcast %cst_1 : f32 to vector<8x128xf32>
    %4 = arith.addf %2, %3 : vector<8x128xf32>
    %c0_2 = arith.constant 0 : index
    %c0_3 = arith.constant 0 : index
    %5 = vector.load %arg6[%c0_2, %c0_3] : memref<8x128xf32, #tpu.memory_space<vmem>>, vector<8x128xf32>
    tpu.vector_store %arg6[%c0_2, %c0_3], %4 {strides = array<i32>} : memref<8x128xf32, #tpu.memory_space<vmem>>, vector<8x128xf32>,
    %cst_4 = arith.constant 9.99999993E-9 : f32
    %6 = vector.broadcast %cst_4 : f32 to vector<8x128xf32>
    %7 = arith.addf %2, %6 : vector<8x128xf32>
    %8 = math.log %7 : vector<8x128xf32>
    %c0_5 = arith.constant 0 : index
    %c0_6 = arith.constant 0 : index
    %9 = vector.load %arg7[%c0_5, %c0_6] : memref<8x128xf32, #tpu.memory_space<vmem>>, vector<8x128xf32>
    tpu.vector_store %arg7[%c0_5, %c0_6], %8 {strides = array<i32>} : memref<8x128xf32, #tpu.memory_space<vmem>>, vector<8x128xf32>,
    %cst_7 = arith.constant 0.000000e+00 : f32
    %10 = vector.broadcast %cst_7 : f32 to vector<24x128xf32>
    %c0_8 = arith.constant 0 : index
    %c0_9 = arith.constant 0 : index
    %11 = vector.load %arg5[%c0_8, %c0_9] : memref<24x128xf32, #tpu.memory_space<vmem>>, vector<24x128xf32>
    tpu.vector_store %arg5[%c0_8, %c0_9], %10 {strides = array<i32>} : memref<24x128xf32, #tpu.memory_space<vmem>>, vector<24x128xf32>,
    %cst_10 = arith.constant 1.000000e+00 : f32
    %12 = vector.broadcast %cst_10 : f32 to vector<1x128xf32>
    %c18 = arith.constant 18 : index
    %c0_11 = arith.constant 0 : index
    %13 = vector.load %arg5[%c18, %c0_11] : memref<24x128xf32, #tpu.memory_space<vmem>>, vector<1x128xf32>
    tpu.vector_store %arg5[%c18, %c0_11], %12 {strides = array<i32>} : memref<24x128xf32, #tpu.memory_space<vmem>>, vector<1x128xf32>,
    %c0_12 = arith.constant 0 : index
    %c0_13 = arith.constant 0 : index
    %14 = vector.load %arg3[%c0_12, %c0_13] : memref<24x24xf32, #tpu.memory_space<vmem>>, vector<24x24xf32>
    %c0_14 = arith.constant 0 : index
    %c0_15 = arith.constant 0 : index
    %15 = vector.load %arg6[%c0_14, %c0_15] : memref<8x128xf32, #tpu.memory_space<vmem>>, vector<1x128xf32>
    %c16 = arith.constant 16 : index
    %c0_16 = arith.constant 0 : index
    %16 = vector.load %arg5[%c16, %c0_16] : memref<24x128xf32, #tpu.memory_space<vmem>>, vector<1x128xf32>
    tpu.vector_store %arg5[%c16, %c0_16], %15 {strides = array<i32>} : memref<24x128xf32, #tpu.memory_space<vmem>>, vector<1x128xf32>,
    %c0_17 = arith.constant 0 : index
    %c0_18 = arith.constant 0 : index
    %17 = vector.load %arg7[%c0_17, %c0_18] : memref<8x128xf32, #tpu.memory_space<vmem>>, vector<1x128xf32>
    %c17 = arith.constant 17 : index
    %c0_19 = arith.constant 0 : index
    %18 = vector.load %arg5[%c17, %c0_19] : memref<24x128xf32, #tpu.memory_space<vmem>>, vector<1x128xf32>
    tpu.vector_store %arg5[%c17, %c0_19], %17 {strides = array<i32>} : memref<24x128xf32, #tpu.memory_space<vmem>>, vector<1x128xf32>,
    %c0_20 = arith.constant 0 : index
    %c0_21 = arith.constant 0 : index
    %19 = vector.load %arg5[%c0_20, %c0_21] : memref<24x128xf32, #tpu.memory_space<vmem>>, vector<24x128xf32>
    %cst_22 = arith.constant dense<0.000000e+00> : vector<24x128xf32>
    %20 = tpu.matmul %14, %19, %cst_22 {dimension_numbers = #tpu.dot_dimension_numbers<[1], [0], [0], [1], [0, 0, 1, 1], [], []>} : vector<24x24xf32>, vector<24x128xf32>, vector<24x128xf32> -> vector<24x128xf32>
    %21 = vector.extract_strided_slice %20 {offsets = [16, 0], sizes = [1, 128], strides = [1, 1]} : vector<24x128xf32> to vector<1x128xf32>
    %c0_23 = arith.constant 0 : index
    %c0_24 = arith.constant 0 : index
    %22 = vector.load %arg8[%c0_23, %c0_24] : memref<8x128xf32, #tpu.memory_space<vmem>>, vector<1x128xf32>
    tpu.vector_store %arg8[%c0_23, %c0_24], %21 {strides = array<i32>} : memref<8x128xf32, #tpu.memory_space<vmem>>, vector<1x128xf32>,
    %23 = vector.extract_strided_slice %20 {offsets = [17, 0], sizes = [1, 128], strides = [1, 1]} : vector<24x128xf32> to vector<1x128xf32>
    %c0_25 = arith.constant 0 : index
    %c0_26 = arith.constant 0 : index
    %24 = vector.load %arg9[%c0_25, %c0_26] : memref<8x128xf32, #tpu.memory_space<vmem>>, vector<1x128xf32>
    tpu.vector_store %arg9[%c0_25, %c0_26], %23 {strides = array<i32>} : memref<8x128xf32, #tpu.memory_space<vmem>>, vector<1x128xf32>,
    %25 = vector.extract_strided_slice %20 {offsets = [0, 0], sizes = [16, 128], strides = [1, 1]} : vector<24x128xf32> to vector<16x128xf32>
    %26 = math.tanh %25 : vector<16x128xf32>
    %c0_27 = arith.constant 0 : index
    %c0_28 = arith.constant 0 : index
    %27 = vector.load %arg5[%c0_27, %c0_28] : memref<24x128xf32, #tpu.memory_space<vmem>>, vector<16x128xf32>
    tpu.vector_store %arg5[%c0_27, %c0_28], %26 {strides = array<i32>} : memref<24x128xf32, #tpu.memory_space<vmem>>, vector<16x128xf32>,
    %c1 = arith.constant 1 : index
    %c0_29 = arith.constant 0 : index
    %28 = vector.load %arg6[%c1, %c0_29] : memref<8x128xf32, #tpu.memory_space<vmem>>, vector<1x128xf32>
    %c16_30 = arith.constant 16 : index
    %c0_31 = arith.constant 0 : index
    %29 = vector.load %arg5[%c16_30, %c0_31] : memref<24x128xf32, #tpu.memory_space<vmem>>, vector<1x128xf32>
    tpu.vector_store %arg5[%c16_30, %c0_31], %28 {strides = array<i32>} : memref<24x128xf32, #tpu.memory_space<vmem>>, vector<1x128xf32>,
    %c1_32 = arith.constant 1 : index
    %c0_33 = arith.constant 0 : index
    %30 = vector.load %arg7[%c1_32, %c0_33] : memref<8x128xf32, #tpu.memory_space<vmem>>, vector<1x128xf32>
    %c17_34 = arith.constant 17 : index
    %c0_35 = arith.constant 0 : index
    %31 = vector.load %arg5[%c17_34, %c0_35] : memref<24x128xf32, #tpu.memory_space<vmem>>, vector<1x128xf32>
    tpu.vector_store %arg5[%c17_34, %c0_35], %30 {strides = array<i32>} : memref<24x128xf32, #tpu.memory_space<vmem>>, vector<1x128xf32>,
    %c0_36 = arith.constant 0 : index
    %c0_37 = arith.constant 0 : index
    %32 = vector.load %arg5[%c0_36, %c0_37] : memref<24x128xf32, #tpu.memory_space<vmem>>, vector<24x128xf32>
    %cst_38 = arith.constant dense<0.000000e+00> : vector<24x128xf32>
    %33 = tpu.matmul %14, %32, %cst_38 {dimension_numbers = #tpu.dot_dimension_numbers<[1], [0], [0], [1], [0, 0, 1, 1], [], []>} : vector<24x24xf32>, vector<24x128xf32>, vector<24x128xf32> -> vector<24x128xf32>
    %34 = vector.extract_strided_slice %33 {offsets = [16, 0], sizes = [1, 128], strides = [1, 1]} : vector<24x128xf32> to vector<1x128xf32>
    %c1_39 = arith.constant 1 : index
    %c0_40 = arith.constant 0 : index
    %35 = vector.load %arg8[%c1_39, %c0_40] : memref<8x128xf32, #tpu.memory_space<vmem>>, vector<1x128xf32>
    tpu.vector_store %arg8[%c1_39, %c0_40], %34 {strides = array<i32>} : memref<8x128xf32, #tpu.memory_space<vmem>>, vector<1x128xf32>,
    %36 = vector.extract_strided_slice %33 {offsets = [17, 0], sizes = [1, 128], strides = [1, 1]} : vector<24x128xf32> to vector<1x128xf32>
    %c1_41 = arith.constant 1 : index
    %c0_42 = arith.constant 0 : index
    %37 = vector.load %arg9[%c1_41, %c0_42] : memref<8x128xf32, #tpu.memory_space<vmem>>, vector<1x128xf32>
    tpu.vector_store %arg9[%c1_41, %c0_42], %36 {strides = array<i32>} : memref<8x128xf32, #tpu.memory_space<vmem>>, vector<1x128xf32>,
    %38 = vector.extract_strided_slice %33 {offsets = [0, 0], sizes = [16, 128], strides = [1, 1]} : vector<24x128xf32> to vector<16x128xf32>
    %39 = math.tanh %38 : vector<16x128xf32>
    %c0_43 = arith.constant 0 : index
    %c0_44 = arith.constant 0 : index
    %40 = vector.load %arg5[%c0_43, %c0_44] : memref<24x128xf32, #tpu.memory_space<vmem>>, vector<16x128xf32>
    tpu.vector_store %arg5[%c0_43, %c0_44], %39 {strides = array<i32>} : memref<24x128xf32, #tpu.memory_space<vmem>>, vector<16x128xf32>,
    %c2 = arith.constant 2 : index
    %c0_45 = arith.constant 0 : index
    %41 = vector.load %arg6[%c2, %c0_45] : memref<8x128xf32, #tpu.memory_space<vmem>>, vector<1x128xf32>
    %c16_46 = arith.constant 16 : index
    %c0_47 = arith.constant 0 : index
    %42 = vector.load %arg5[%c16_46, %c0_47] : memref<24x128xf32, #tpu.memory_space<vmem>>, vector<1x128xf32>
    tpu.vector_store %arg5[%c16_46, %c0_47], %41 {strides = array<i32>} : memref<24x128xf32, #tpu.memory_space<vmem>>, vector<1x128xf32>,
    %c2_48 = arith.constant 2 : index
    %c0_49 = arith.constant 0 : index
    %43 = vector.load %arg7[%c2_48, %c0_49] : memref<8x128xf32, #tpu.memory_space<vmem>>, vector<1x128xf32>
    %c17_50 = arith.constant 17 : index
    %c0_51 = arith.constant 0 : index
    %44 = vector.load %arg5[%c17_50, %c0_51] : memref<24x128xf32, #tpu.memory_space<vmem>>, vector<1x128xf32>
    tpu.vector_store %arg5[%c17_50, %c0_51], %43 {strides = array<i32>} : memref<24x128xf32, #tpu.memory_space<vmem>>, vector<1x128xf32>,
    %c0_52 = arith.constant 0 : index
    %c0_53 = arith.constant 0 : index
    %45 = vector.load %arg5[%c0_52, %c0_53] : memref<24x128xf32, #tpu.memory_space<vmem>>, vector<24x128xf32>
    %cst_54 = arith.constant dense<0.000000e+00> : vector<24x128xf32>
    %46 = tpu.matmul %14, %45, %cst_54 {dimension_numbers = #tpu.dot_dimension_numbers<[1], [0], [0], [1], [0, 0, 1, 1], [], []>} : vector<24x24xf32>, vector<24x128xf32>, vector<24x128xf32> -> vector<24x128xf32>
    %47 = vector.extract_strided_slice %46 {offsets = [16, 0], sizes = [1, 128], strides = [1, 1]} : vector<24x128xf32> to vector<1x128xf32>
    %c2_55 = arith.constant 2 : index
    %c0_56 = arith.constant 0 : index
    %48 = vector.load %arg8[%c2_55, %c0_56] : memref<8x128xf32, #tpu.memory_space<vmem>>, vector<1x128xf32>
    tpu.vector_store %arg8[%c2_55, %c0_56], %47 {strides = array<i32>} : memref<8x128xf32, #tpu.memory_space<vmem>>, vector<1x128xf32>,
    %49 = vector.extract_strided_slice %46 {offsets = [17, 0], sizes = [1, 128], strides = [1, 1]} : vector<24x128xf32> to vector<1x128xf32>
    %c2_57 = arith.constant 2 : index
    %c0_58 = arith.constant 0 : index
    %50 = vector.load %arg9[%c2_57, %c0_58] : memref<8x128xf32, #tpu.memory_space<vmem>>, vector<1x128xf32>
    tpu.vector_store %arg9[%c2_57, %c0_58], %49 {strides = array<i32>} : memref<8x128xf32, #tpu.memory_space<vmem>>, vector<1x128xf32>,
    %51 = vector.extract_strided_slice %46 {offsets = [0, 0], sizes = [16, 128], strides = [1, 1]} : vector<24x128xf32> to vector<16x128xf32>
    %52 = math.tanh %51 : vector<16x128xf32>
    %c0_59 = arith.constant 0 : index
    %c0_60 = arith.constant 0 : index
    %53 = vector.load %arg5[%c0_59, %c0_60] : memref<24x128xf32, #tpu.memory_space<vmem>>, vector<16x128xf32>
    tpu.vector_store %arg5[%c0_59, %c0_60], %52 {strides = array<i32>} : memref<24x128xf32, #tpu.memory_space<vmem>>, vector<16x128xf32>,
    %c3 = arith.constant 3 : index
    %c0_61 = arith.constant 0 : index
    %54 = vector.load %arg6[%c3, %c0_61] : memref<8x128xf32, #tpu.memory_space<vmem>>, vector<1x128xf32>
    %c16_62 = arith.constant 16 : index
    %c0_63 = arith.constant 0 : index
    %55 = vector.load %arg5[%c16_62, %c0_63] : memref<24x128xf32, #tpu.memory_space<vmem>>, vector<1x128xf32>
    tpu.vector_store %arg5[%c16_62, %c0_63], %54 {strides = array<i32>} : memref<24x128xf32, #tpu.memory_space<vmem>>, vector<1x128xf32>,
    %c3_64 = arith.constant 3 : index
    %c0_65 = arith.constant 0 : index
    %56 = vector.load %arg7[%c3_64, %c0_65] : memref<8x128xf32, #tpu.memory_space<vmem>>, vector<1x128xf32>
    %c17_66 = arith.constant 17 : index
    %c0_67 = arith.constant 0 : index
    %57 = vector.load %arg5[%c17_66, %c0_67] : memref<24x128xf32, #tpu.memory_space<vmem>>, vector<1x128xf32>
    tpu.vector_store %arg5[%c17_66, %c0_67], %56 {strides = array<i32>} : memref<24x128xf32, #tpu.memory_space<vmem>>, vector<1x128xf32>,
    %c0_68 = arith.constant 0 : index
    %c0_69 = arith.constant 0 : index
    %58 = vector.load %arg5[%c0_68, %c0_69] : memref<24x128xf32, #tpu.memory_space<vmem>>, vector<24x128xf32>
    %cst_70 = arith.constant dense<0.000000e+00> : vector<24x128xf32>
    %59 = tpu.matmul %14, %58, %cst_70 {dimension_numbers = #tpu.dot_dimension_numbers<[1], [0], [0], [1], [0, 0, 1, 1], [], []>} : vector<24x24xf32>, vector<24x128xf32>, vector<24x128xf32> -> vector<24x128xf32>
    %60 = vector.extract_strided_slice %59 {offsets = [16, 0], sizes = [1, 128], strides = [1, 1]} : vector<24x128xf32> to vector<1x128xf32>
    %c3_71 = arith.constant 3 : index
    %c0_72 = arith.constant 0 : index
    %61 = vector.load %arg8[%c3_71, %c0_72] : memref<8x128xf32, #tpu.memory_space<vmem>>, vector<1x128xf32>
    tpu.vector_store %arg8[%c3_71, %c0_72], %60 {strides = array<i32>} : memref<8x128xf32, #tpu.memory_space<vmem>>, vector<1x128xf32>,
    %62 = vector.extract_strided_slice %59 {offsets = [17, 0], sizes = [1, 128], strides = [1, 1]} : vector<24x128xf32> to vector<1x128xf32>
    %c3_73 = arith.constant 3 : index
    %c0_74 = arith.constant 0 : index
    %63 = vector.load %arg9[%c3_73, %c0_74] : memref<8x128xf32, #tpu.memory_space<vmem>>, vector<1x128xf32>
    tpu.vector_store %arg9[%c3_73, %c0_74], %62 {strides = array<i32>} : memref<8x128xf32, #tpu.memory_space<vmem>>, vector<1x128xf32>,
    %64 = vector.extract_strided_slice %59 {offsets = [0, 0], sizes = [16, 128], strides = [1, 1]} : vector<24x128xf32> to vector<16x128xf32>
    %65 = math.tanh %64 : vector<16x128xf32>
    %c0_75 = arith.constant 0 : index
    %c0_76 = arith.constant 0 : index
    %66 = vector.load %arg5[%c0_75, %c0_76] : memref<24x128xf32, #tpu.memory_space<vmem>>, vector<16x128xf32>
    tpu.vector_store %arg5[%c0_75, %c0_76], %65 {strides = array<i32>} : memref<24x128xf32, #tpu.memory_space<vmem>>, vector<16x128xf32>,
    %c4 = arith.constant 4 : index
    %c0_77 = arith.constant 0 : index
    %67 = vector.load %arg6[%c4, %c0_77] : memref<8x128xf32, #tpu.memory_space<vmem>>, vector<1x128xf32>
    %c16_78 = arith.constant 16 : index
    %c0_79 = arith.constant 0 : index
    %68 = vector.load %arg5[%c16_78, %c0_79] : memref<24x128xf32, #tpu.memory_space<vmem>>, vector<1x128xf32>
    tpu.vector_store %arg5[%c16_78, %c0_79], %67 {strides = array<i32>} : memref<24x128xf32, #tpu.memory_space<vmem>>, vector<1x128xf32>,
    %c4_80 = arith.constant 4 : index
    %c0_81 = arith.constant 0 : index
    %69 = vector.load %arg7[%c4_80, %c0_81] : memref<8x128xf32, #tpu.memory_space<vmem>>, vector<1x128xf32>
    %c17_82 = arith.constant 17 : index
    %c0_83 = arith.constant 0 : index
    %70 = vector.load %arg5[%c17_82, %c0_83] : memref<24x128xf32, #tpu.memory_space<vmem>>, vector<1x128xf32>
    tpu.vector_store %arg5[%c17_82, %c0_83], %69 {strides = array<i32>} : memref<24x128xf32, #tpu.memory_space<vmem>>, vector<1x128xf32>,
    %c0_84 = arith.constant 0 : index
    %c0_85 = arith.constant 0 : index
    %71 = vector.load %arg5[%c0_84, %c0_85] : memref<24x128xf32, #tpu.memory_space<vmem>>, vector<24x128xf32>
    %cst_86 = arith.constant dense<0.000000e+00> : vector<24x128xf32>
    %72 = tpu.matmul %14, %71, %cst_86 {dimension_numbers = #tpu.dot_dimension_numbers<[1], [0], [0], [1], [0, 0, 1, 1], [], []>} : vector<24x24xf32>, vector<24x128xf32>, vector<24x128xf32> -> vector<24x128xf32>
    %73 = vector.extract_strided_slice %72 {offsets = [16, 0], sizes = [1, 128], strides = [1, 1]} : vector<24x128xf32> to vector<1x128xf32>
    %c4_87 = arith.constant 4 : index
    %c0_88 = arith.constant 0 : index
    %74 = vector.load %arg8[%c4_87, %c0_88] : memref<8x128xf32, #tpu.memory_space<vmem>>, vector<1x128xf32>
    tpu.vector_store %arg8[%c4_87, %c0_88], %73 {strides = array<i32>} : memref<8x128xf32, #tpu.memory_space<vmem>>, vector<1x128xf32>,
    %75 = vector.extract_strided_slice %72 {offsets = [17, 0], sizes = [1, 128], strides = [1, 1]} : vector<24x128xf32> to vector<1x128xf32>
    %c4_89 = arith.constant 4 : index
    %c0_90 = arith.constant 0 : index
    %76 = vector.load %arg9[%c4_89, %c0_90] : memref<8x128xf32, #tpu.memory_space<vmem>>, vector<1x128xf32>
    tpu.vector_store %arg9[%c4_89, %c0_90], %75 {strides = array<i32>} : memref<8x128xf32, #tpu.memory_space<vmem>>, vector<1x128xf32>,
    %77 = vector.extract_strided_slice %72 {offsets = [0, 0], sizes = [16, 128], strides = [1, 1]} : vector<24x128xf32> to vector<16x128xf32>
    %78 = math.tanh %77 : vector<16x128xf32>
    %c0_91 = arith.constant 0 : index
    %c0_92 = arith.constant 0 : index
    %79 = vector.load %arg5[%c0_91, %c0_92] : memref<24x128xf32, #tpu.memory_space<vmem>>, vector<16x128xf32>
    tpu.vector_store %arg5[%c0_91, %c0_92], %78 {strides = array<i32>} : memref<24x128xf32, #tpu.memory_space<vmem>>, vector<16x128xf32>,
    %c5 = arith.constant 5 : index
    %c0_93 = arith.constant 0 : index
    %80 = vector.load %arg6[%c5, %c0_93] : memref<8x128xf32, #tpu.memory_space<vmem>>, vector<1x128xf32>
    %c16_94 = arith.constant 16 : index
    %c0_95 = arith.constant 0 : index
    %81 = vector.load %arg5[%c16_94, %c0_95] : memref<24x128xf32, #tpu.memory_space<vmem>>, vector<1x128xf32>
    tpu.vector_store %arg5[%c16_94, %c0_95], %80 {strides = array<i32>} : memref<24x128xf32, #tpu.memory_space<vmem>>, vector<1x128xf32>,
    %c5_96 = arith.constant 5 : index
    %c0_97 = arith.constant 0 : index
    %82 = vector.load %arg7[%c5_96, %c0_97] : memref<8x128xf32, #tpu.memory_space<vmem>>, vector<1x128xf32>
    %c17_98 = arith.constant 17 : index
    %c0_99 = arith.constant 0 : index
    %83 = vector.load %arg5[%c17_98, %c0_99] : memref<24x128xf32, #tpu.memory_space<vmem>>, vector<1x128xf32>
    tpu.vector_store %arg5[%c17_98, %c0_99], %82 {strides = array<i32>} : memref<24x128xf32, #tpu.memory_space<vmem>>, vector<1x128xf32>,
    %c0_100 = arith.constant 0 : index
    %c0_101 = arith.constant 0 : index
    %84 = vector.load %arg5[%c0_100, %c0_101] : memref<24x128xf32, #tpu.memory_space<vmem>>, vector<24x128xf32>
    %cst_102 = arith.constant dense<0.000000e+00> : vector<24x128xf32>
    %85 = tpu.matmul %14, %84, %cst_102 {dimension_numbers = #tpu.dot_dimension_numbers<[1], [0], [0], [1], [0, 0, 1, 1], [], []>} : vector<24x24xf32>, vector<24x128xf32>, vector<24x128xf32> -> vector<24x128xf32>
    %86 = vector.extract_strided_slice %85 {offsets = [16, 0], sizes = [1, 128], strides = [1, 1]} : vector<24x128xf32> to vector<1x128xf32>
    %c5_103 = arith.constant 5 : index
    %c0_104 = arith.constant 0 : index
    %87 = vector.load %arg8[%c5_103, %c0_104] : memref<8x128xf32, #tpu.memory_space<vmem>>, vector<1x128xf32>
    tpu.vector_store %arg8[%c5_103, %c0_104], %86 {strides = array<i32>} : memref<8x128xf32, #tpu.memory_space<vmem>>, vector<1x128xf32>,
    %88 = vector.extract_strided_slice %85 {offsets = [17, 0], sizes = [1, 128], strides = [1, 1]} : vector<24x128xf32> to vector<1x128xf32>
    %c5_105 = arith.constant 5 : index
    %c0_106 = arith.constant 0 : index
    %89 = vector.load %arg9[%c5_105, %c0_106] : memref<8x128xf32, #tpu.memory_space<vmem>>, vector<1x128xf32>
    tpu.vector_store %arg9[%c5_105, %c0_106], %88 {strides = array<i32>} : memref<8x128xf32, #tpu.memory_space<vmem>>, vector<1x128xf32>,
    %90 = vector.extract_strided_slice %85 {offsets = [0, 0], sizes = [16, 128], strides = [1, 1]} : vector<24x128xf32> to vector<16x128xf32>
    %91 = math.tanh %90 : vector<16x128xf32>
    %c0_107 = arith.constant 0 : index
    %c0_108 = arith.constant 0 : index
    %92 = vector.load %arg5[%c0_107, %c0_108] : memref<24x128xf32, #tpu.memory_space<vmem>>, vector<16x128xf32>
    tpu.vector_store %arg5[%c0_107, %c0_108], %91 {strides = array<i32>} : memref<24x128xf32, #tpu.memory_space<vmem>>, vector<16x128xf32>,
    %c6 = arith.constant 6 : index
    %c0_109 = arith.constant 0 : index
    %93 = vector.load %arg6[%c6, %c0_109] : memref<8x128xf32, #tpu.memory_space<vmem>>, vector<1x128xf32>
    %c16_110 = arith.constant 16 : index
    %c0_111 = arith.constant 0 : index
    %94 = vector.load %arg5[%c16_110, %c0_111] : memref<24x128xf32, #tpu.memory_space<vmem>>, vector<1x128xf32>
    tpu.vector_store %arg5[%c16_110, %c0_111], %93 {strides = array<i32>} : memref<24x128xf32, #tpu.memory_space<vmem>>, vector<1x128xf32>,
    %c6_112 = arith.constant 6 : index
    %c0_113 = arith.constant 0 : index
    %95 = vector.load %arg7[%c6_112, %c0_113] : memref<8x128xf32, #tpu.memory_space<vmem>>, vector<1x128xf32>
    %c17_114 = arith.constant 17 : index
    %c0_115 = arith.constant 0 : index
    %96 = vector.load %arg5[%c17_114, %c0_115] : memref<24x128xf32, #tpu.memory_space<vmem>>, vector<1x128xf32>
    tpu.vector_store %arg5[%c17_114, %c0_115], %95 {strides = array<i32>} : memref<24x128xf32, #tpu.memory_space<vmem>>, vector<1x128xf32>,
    %c0_116 = arith.constant 0 : index
    %c0_117 = arith.constant 0 : index
    %97 = vector.load %arg5[%c0_116, %c0_117] : memref<24x128xf32, #tpu.memory_space<vmem>>, vector<24x128xf32>
    %cst_118 = arith.constant dense<0.000000e+00> : vector<24x128xf32>
    %98 = tpu.matmul %14, %97, %cst_118 {dimension_numbers = #tpu.dot_dimension_numbers<[1], [0], [0], [1], [0, 0, 1, 1], [], []>} : vector<24x24xf32>, vector<24x128xf32>, vector<24x128xf32> -> vector<24x128xf32>
    %99 = vector.extract_strided_slice %98 {offsets = [16, 0], sizes = [1, 128], strides = [1, 1]} : vector<24x128xf32> to vector<1x128xf32>
    %c6_119 = arith.constant 6 : index
    %c0_120 = arith.constant 0 : index
    %100 = vector.load %arg8[%c6_119, %c0_120] : memref<8x128xf32, #tpu.memory_space<vmem>>, vector<1x128xf32>
    tpu.vector_store %arg8[%c6_119, %c0_120], %99 {strides = array<i32>} : memref<8x128xf32, #tpu.memory_space<vmem>>, vector<1x128xf32>,
    %101 = vector.extract_strided_slice %98 {offsets = [17, 0], sizes = [1, 128], strides = [1, 1]} : vector<24x128xf32> to vector<1x128xf32>
    %c6_121 = arith.constant 6 : index
    %c0_122 = arith.constant 0 : index
    %102 = vector.load %arg9[%c6_121, %c0_122] : memref<8x128xf32, #tpu.memory_space<vmem>>, vector<1x128xf32>
    tpu.vector_store %arg9[%c6_121, %c0_122], %101 {strides = array<i32>} : memref<8x128xf32, #tpu.memory_space<vmem>>, vector<1x128xf32>,
    %103 = vector.extract_strided_slice %98 {offsets = [0, 0], sizes = [16, 128], strides = [1, 1]} : vector<24x128xf32> to vector<16x128xf32>
    %104 = math.tanh %103 : vector<16x128xf32>
    %c0_123 = arith.constant 0 : index
    %c0_124 = arith.constant 0 : index
    %105 = vector.load %arg5[%c0_123, %c0_124] : memref<24x128xf32, #tpu.memory_space<vmem>>, vector<16x128xf32>
    tpu.vector_store %arg5[%c0_123, %c0_124], %104 {strides = array<i32>} : memref<24x128xf32, #tpu.memory_space<vmem>>, vector<16x128xf32>,
    %c7 = arith.constant 7 : index
    %c0_125 = arith.constant 0 : index
    %106 = vector.load %arg6[%c7, %c0_125] : memref<8x128xf32, #tpu.memory_space<vmem>>, vector<1x128xf32>
    %c16_126 = arith.constant 16 : index
    %c0_127 = arith.constant 0 : index
    %107 = vector.load %arg5[%c16_126, %c0_127] : memref<24x128xf32, #tpu.memory_space<vmem>>, vector<1x128xf32>
    tpu.vector_store %arg5[%c16_126, %c0_127], %106 {strides = array<i32>} : memref<24x128xf32, #tpu.memory_space<vmem>>, vector<1x128xf32>,
    %c7_128 = arith.constant 7 : index
    %c0_129 = arith.constant 0 : index
    %108 = vector.load %arg7[%c7_128, %c0_129] : memref<8x128xf32, #tpu.memory_space<vmem>>, vector<1x128xf32>
    %c17_130 = arith.constant 17 : index
    %c0_131 = arith.constant 0 : index
    %109 = vector.load %arg5[%c17_130, %c0_131] : memref<24x128xf32, #tpu.memory_space<vmem>>, vector<1x128xf32>
    tpu.vector_store %arg5[%c17_130, %c0_131], %108 {strides = array<i32>} : memref<24x128xf32, #tpu.memory_space<vmem>>, vector<1x128xf32>,
    %c0_132 = arith.constant 0 : index
    %c0_133 = arith.constant 0 : index
    %110 = vector.load %arg5[%c0_132, %c0_133] : memref<24x128xf32, #tpu.memory_space<vmem>>, vector<24x128xf32>
    %cst_134 = arith.constant dense<0.000000e+00> : vector<24x128xf32>
    %111 = tpu.matmul %14, %110, %cst_134 {dimension_numbers = #tpu.dot_dimension_numbers<[1], [0], [0], [1], [0, 0, 1, 1], [], []>} : vector<24x24xf32>, vector<24x128xf32>, vector<24x128xf32> -> vector<24x128xf32>
    %112 = vector.extract_strided_slice %111 {offsets = [16, 0], sizes = [1, 128], strides = [1, 1]} : vector<24x128xf32> to vector<1x128xf32>
    %c7_135 = arith.constant 7 : index
    %c0_136 = arith.constant 0 : index
    %113 = vector.load %arg8[%c7_135, %c0_136] : memref<8x128xf32, #tpu.memory_space<vmem>>, vector<1x128xf32>
    tpu.vector_store %arg8[%c7_135, %c0_136], %112 {strides = array<i32>} : memref<8x128xf32, #tpu.memory_space<vmem>>, vector<1x128xf32>,
    %114 = vector.extract_strided_slice %111 {offsets = [17, 0], sizes = [1, 128], strides = [1, 1]} : vector<24x128xf32> to vector<1x128xf32>
    %c7_137 = arith.constant 7 : index
    %c0_138 = arith.constant 0 : index
    %115 = vector.load %arg9[%c7_137, %c0_138] : memref<8x128xf32, #tpu.memory_space<vmem>>, vector<1x128xf32>
    tpu.vector_store %arg9[%c7_137, %c0_138], %114 {strides = array<i32>} : memref<8x128xf32, #tpu.memory_space<vmem>>, vector<1x128xf32>,
    %116 = vector.extract_strided_slice %111 {offsets = [0, 0], sizes = [16, 128], strides = [1, 1]} : vector<24x128xf32> to vector<16x128xf32>
    %117 = math.tanh %116 : vector<16x128xf32>
    %c0_139 = arith.constant 0 : index
    %c0_140 = arith.constant 0 : index
    %118 = vector.load %arg5[%c0_139, %c0_140] : memref<24x128xf32, #tpu.memory_space<vmem>>, vector<16x128xf32>
    tpu.vector_store %arg5[%c0_139, %c0_140], %117 {strides = array<i32>} : memref<24x128xf32, #tpu.memory_space<vmem>>, vector<16x128xf32>,
    %c0_141 = arith.constant 0 : index
    %c0_142 = arith.constant 0 : index
    %119 = vector.load %arg8[%c0_141, %c0_142] : memref<8x128xf32, #tpu.memory_space<vmem>>, vector<8x128xf32>
    %c0_143 = arith.constant 0 : index
    %c0_144 = arith.constant 0 : index
    %120 = vector.load %arg9[%c0_143, %c0_144] : memref<8x128xf32, #tpu.memory_space<vmem>>, vector<8x128xf32>
    %c0_145 = arith.constant 0 : index
    %c0_146 = arith.constant 0 : index
    %121 = vector.load %arg1[%c0_145, %c0_146] : memref<8x128xf32, #tpu.memory_space<vmem>>, vector<8x128xf32>
    %cst_147 = arith.constant 9.99999993E-9 : f32
    %122 = vector.broadcast %cst_147 : f32 to vector<8x128xf32>
    %123 = arith.maximumf %121, %122 : vector<8x128xf32>
    %124 = math.log %123 : vector<8x128xf32>
    %125 = arith.subf %124, %119 : vector<8x128xf32>
    %cst_148 = arith.constant 0.000000e+00 : f32
    %126 = vector.broadcast %cst_148 : f32 to vector<8x128xf32>
    %127 = arith.subf %126, %120 : vector<8x128xf32>
    %128 = math.exp %127 : vector<8x128xf32>
    %129 = arith.mulf %125, %128 : vector<8x128xf32>
    %cst_149 = arith.constant 0.000000e+00 : f32
    %130 = vector.broadcast %cst_149 : f32 to vector<8x128xf32>
    %131 = arith.subf %130, %124 : vector<8x128xf32>
    %132 = arith.subf %131, %120 : vector<8x128xf32>
    %cst_150 = arith.constant 0.918938517 : f32
    %133 = vector.broadcast %cst_150 : f32 to vector<8x128xf32>
    %134 = arith.subf %132, %133 : vector<8x128xf32>
    %cst_151 = arith.constant 5.000000e-01 : f32
    %135 = vector.broadcast %cst_151 : f32 to vector<8x128xf32>
    %136 = arith.mulf %135, %129 : vector<8x128xf32>
    %137 = arith.mulf %136, %129 : vector<8x128xf32>
    %138 = arith.subf %134, %137 : vector<8x128xf32>
    %cst_152 = arith.constant 0.707106769 : f32
    %139 = vector.broadcast %cst_152 : f32 to vector<8x128xf32>
    %140 = arith.mulf %129, %139 : vector<8x128xf32>
    %141 = math.erf %140 : vector<8x128xf32>
    %cst_153 = arith.constant 1.000000e+00 : f32
    %142 = vector.broadcast %cst_153 : f32 to vector<8x128xf32>
    %143 = arith.addf %142, %141 : vector<8x128xf32>
    %cst_154 = arith.constant 5.000000e-01 : f32
    %144 = vector.broadcast %cst_154 : f32 to vector<8x128xf32>
    %145 = arith.mulf %144, %143 : vector<8x128xf32>
    %cst_155 = arith.constant 1.000000e+00 : f32
    %146 = vector.broadcast %cst_155 : f32 to vector<8x128xf32>
    %147 = arith.subf %146, %145 : vector<8x128xf32>
    %148 = math.log %147 : vector<8x128xf32>
    %c0_156 = arith.constant 0 : index
    %c0_157 = arith.constant 0 : index
    %149 = vector.load %arg2[%c0_156, %c0_157] : memref<8x128xf32, #tpu.memory_space<vmem>>, vector<8x128xf32>
    %cst_158 = arith.constant 0.000000e+00 : f32
    %150 = vector.broadcast %cst_158 : f32 to vector<8x128xf32>
    %151 = arith.cmpf ogt, %149, %150 : vector<8x128xf32>
    %152 = tpu.iota {dimensions = array<i32: 0>} : vector<8x128xi32>
    %c-1_i32 = arith.constant -1 : i32
    %153 = vector.broadcast %c-1_i32 : i32 to vector<8x128xi32>
    %154 = arith.select %151, %152, %153 : vector<8x128xi1>, vector<8x128xi32>
    %cst_159 = arith.constant dense<-2147483648> : vector<128xi32>
    %155 = vector.multi_reduction <maxsi>, %154, %cst_159 [0] : vector<8x128xi32> to vector<128xi32>
    %156 = vector.shape_cast %155 : vector<128xi32> to vector<1x128xi32>
    %157 = vector.broadcast %156 : vector<1x128xi32> to vector<8x128xi32>
    %158 = arith.cmpi eq, %152, %157 : vector<8x128xi32>
    %159 = arith.andi %158, %151 : vector<8x128xi1>
    %cst_160 = arith.constant 0.000000e+00 : f32
    %160 = vector.broadcast %cst_160 : f32 to vector<8x128xf32>
    %161 = arith.select %151, %138, %160 : vector<8x128xi1>, vector<8x128xf32>
    %162 = arith.select %159, %148, %161 : vector<8x128xi1>, vector<8x128xf32>
    %cst_161 = arith.constant dense<0.000000e+00> : vector<128xf32>
    %163 = vector.multi_reduction <add>, %162, %cst_161 [0] : vector<8x128xf32> to vector<128xf32>
    %164 = vector.shape_cast %163 : vector<128xf32> to vector<1x128xf32>
    %c0_162 = arith.constant 0 : index
    %c0_163 = arith.constant 0 : index
    %165 = vector.load %arg4[%c0_162, %c0_163] : memref<1x128xf32, #tpu.memory_space<vmem>>, vector<1x128xf32>
    tpu.vector_store %arg4[%c0_162, %c0_163], %164 {strides = array<i32>} : memref<1x128xf32, #tpu.memory_space<vmem>>, vector<1x128xf32>,
    return
  }
  func.func @transform_0(%arg0: i32) -> (i32, i32) {
    %c0_i32 = arith.constant 0 : i32
    %c0_i32_0 = arith.constant 0 : i32
    return %c0_i32, %arg0 : i32, i32
  }
  func.func @transform_1(%arg0: i32) -> (i32, i32) {
    %c0_i32 = arith.constant 0 : i32
    %c0_i32_0 = arith.constant 0 : i32
    return %c0_i32, %arg0 : i32, i32
  }
  func.func @transform_2(%arg0: i32) -> (i32, i32) {
    %c0_i32 = arith.constant 0 : i32
    %c0_i32_0 = arith.constant 0 : i32
    %c0_i32_1 = arith.constant 0 : i32
    return %c0_i32, %c0_i32_0 : i32, i32
  }
  func.func @transform_3(%arg0: i32) -> (i32, i32) {
    %c0_i32 = arith.constant 0 : i32
    %c0_i32_0 = arith.constant 0 : i32
    return %c0_i32, %arg0 : i32, i32
  }
}

</mosaic_0001>

<llo_original>
// kernel: neural_tpp_log_likelihood.1
$region0: #{neural_tpp_log_likelihood.1}
  #allocation0 [shape = 'u32[]', space=smem, size = 0x4, offset = 0x4, fixed_abs, tag = 'smem constant byte address 0x4 - core index']
  #allocation1 [shape = 'u32[144,128]{1,0:T(1,128)}', space=vmem, size = 0x12000, scoped, tag = 'internal scratch']
  #allocation2 [shape = 'f32[24,128]{1,0:T(8,128)}', space=vmem, size = 0x3000, scoped, tag = 'scratch operand']
  #allocation3 [shape = 'f32[8,128]{1,0:T(8,128)}', space=vmem, size = 0x1000, scoped, tag = 'scratch operand']
  #allocation4 [shape = 'f32[8,128]{1,0:T(8,128)}', space=vmem, size = 0x1000, scoped, tag = 'scratch operand']
  #allocation5 [shape = 'f32[8,128]{1,0:T(8,128)}', space=vmem, size = 0x1000, scoped, tag = 'scratch operand']
  #allocation6 [shape = 'f32[8,128]{1,0:T(8,128)}', space=vmem, size = 0x1000, scoped, tag = 'scratch operand']
  %s0 = inlined_call_operand.vmem [shape: f32[8,128], index: 0, kind: input, shape index: {}]
  %s1 = inlined_call_operand.vmem [shape: f32[8,128], index: 1, kind: input, shape index: {}]
  %s2 = inlined_call_operand.vmem [shape: f32[24,24], index: 2, kind: input, shape index: {}]
  %s3 = inlined_call_operand.vmem [shape: f32[1,128], index: 3, kind: output, shape index: {}]
  %s4 = sld [smem:[#allocation0]]
  $region22: #{neural_tpp_log_likelihood.1} parent=0
    _
  %s6 = ssub.s32 1, %s4
  %s7 = scalar_select 0, %s6, %s4
  // Predicated region
  $region2: #{neural_tpp_log_likelihood.1} parent=0 // pred_check
    _
  $region3: #{neural_tpp_log_likelihood.1} parent=0 // pred_check_branch
    %9 = sbr.rel (0) target = $region5
  $region4: #{neural_tpp_log_likelihood.1} parent=0 // pred_region
    _
  $region5: #{neural_tpp_log_likelihood.1} parent=0 // pred_fallthru
    _
  // Predicated region
  $region6: #{neural_tpp_log_likelihood.1} parent=0 // pred_check
    _
  $region7: #{neural_tpp_log_likelihood.1} parent=0 // pred_check_branch
    %11 = sbr.rel (0) target = $region9
  $region8: #{neural_tpp_log_likelihood.1} parent=0 // pred_region
    _
  $region9: #{neural_tpp_log_likelihood.1} parent=0 // pred_fallthru
    _
  // Predicated region
  $region10: #{neural_tpp_log_likelihood.1} parent=0 // pred_check
    _
  $region11: #{neural_tpp_log_likelihood.1} parent=0 // pred_check_branch
    %13 = sbr.rel (0) target = $region13
  $region12: #{neural_tpp_log_likelihood.1} parent=0 // pred_region
    _
  $region13: #{neural_tpp_log_likelihood.1} parent=0 // pred_fallthru
    _
  %v14 = vld [vmem:[%s0] sm:$0xff]
  %v15 = vmax.f32 %v14, 1e-08
  %v16 = vadd.f32 %v15, 1e-08
  %17 = vst [vmem:[#allocation3] sm:$0xff] %v16
  %v18 = vlog2.pop %v16
  %v19 = vmul.f32 %v18, 0.6931472
  %20 = vst [vmem:[#allocation4] sm:$0xff] %v19
  %21 = vst [vmem:[#allocation2] sm:$0xff] 0.0
  %22 = vst [vmem:[#allocation2 + $0x8] sm:$0xff] 0.0
  %23 = vst [vmem:[#allocation2 + $0x10] sm:$0xff] 0.0
  %24 = vst [vmem:[#allocation2 + $0x12] sm:$0x1] 1.0
  %v25 = vld [vmem:[%s2] sm:$0xff]
  %v26 = vld [vmem:[%s2 + $0x8] sm:$0xff]
  %v27 = vld [vmem:[%s2 + $0x10] sm:$0xff]
  %v28 = vld [vmem:[#allocation3] sm:$0x1]
  %29 = vst [vmem:[#allocation2 + $0x10] sm:$0x1] %v28
  %v30 = vld [vmem:[#allocation4] sm:$0x1]
  %31 = vst [vmem:[#allocation2 + $0x11] sm:$0x1] %v30
  %v32 = vld [vmem:[#allocation2] sm:$0xff]
  %v33 = vld [vmem:[#allocation2 + $0x8] sm:$0xff]
  %v34 = vld [vmem:[#allocation2 + $0x10] sm:$0xff]
  %vm35 = vcmask 195584
  %v37 = vsel %vm35, %v25, 0
  %v40 = vsel %vm35, %v26, 0
  %v43 = vsel %vm35, %v27, 0
  %45 = vmatprep.subr.mxu0 0.0
  %46 = vmatpush1.msra.mxu0 %v32
  %47 = vmatprep.subr.mxu0 0.0
  %48 = vmatpush1.msra.mxu0 %v33
  %49 = vmatprep.subr.mxu0 0.0
  %50 = vmatpush1.msra.mxu0 %v34
  %51 = vmatprep.subr.mxu0 0.0
  %52 = vmatpush1.msra.mxu0 0.0
  %53 = vmatprep.subr.mxu0 0.0
  %54 = vmatpush1.msra.mxu0 0.0
  %55 = vmatprep.subr.mxu0 0.0
  %56 = vmatpush1.msra.mxu0 0.0
  %57 = vmatprep.subr.mxu0 0.0
  %58 = vmatpush1.msra.mxu0 0.0
  %59 = vmatprep.subr.mxu0 0.0
  %60 = vmatpush1.msra.mxu0 0.0
  %61 = vmatprep.subr.mxu0 0.0
  %62 = vmatpush1.msra.mxu0 0.0
  %63 = vmatprep.subr.mxu0 0.0
  %64 = vmatpush1.msra.mxu0 0.0
  %65 = vmatprep.subr.mxu0 0.0
  %66 = vmatpush1.msra.mxu0 0.0
  %67 = vmatprep.subr.mxu0 0.0
  %68 = vmatpush1.msra.mxu0 0.0
  %69 = vmatprep.subr.mxu0 0.0
  %70 = vmatpush1.msra.mxu0 0.0
  %71 = vmatprep.subr.mxu0 0.0
  %72 = vmatpush1.msra.mxu0 0.0
  %73 = vmatprep.subr.mxu0 0.0
  %74 = vmatpush1.msra.mxu0 0.0
  %75 = vmatprep.subr.mxu0 0.0
  %76 = vmatpush1.msra.mxu0 0.0
  %77 = vmatprep.subr.mxu0 0.0
  %78 = vmatpush1.msra.mxu0 0.0
  %79 = vmatprep.subr.mxu0 0.0
  %80 = vmatpush1.msra.mxu0 0.0
  %81 = vmatprep.subr.mxu0 0.0
  %82 = vmatpush1.msra.mxu0 0.0
  %83 = vmatprep.subr.mxu0 0.0
  %84 = vmatpush1.msra.mxu0 0.0
  %85 = vmatprep.subr.mxu0 0.0
  %86 = vmatpush1.msra.mxu0 0.0
  %87 = vmatprep.subr.mxu0 0.0
  %88 = vmatpush1.msra.mxu0 0.0
  %89 = vmatprep.subr.mxu0 0.0
  %90 = vmatpush1.msra.mxu0 0.0
  %91 = vmatprep.subr.mxu0 0.0
  %92 = vmatpush1.msra.mxu0 0.0
  %93 = vmatprep.subr.mxu0 0.0
  %94 = vmatpush1.msra.mxu0 0.0
  %95 = vmatprep.subr.mxu0 0.0
  %96 = vmatpush1.msra.mxu0 0.0
  %97 = vmatprep.subr.mxu0 0.0
  %98 = vmatpush1.msra.mxu0 0.0
  %99 = vmatprep.subr.mxu0 0.0
  %100 = vmatpush1.msra.mxu0 0.0
  %101 = vmatprep.subr.mxu0 0.0
  %102 = vmatpush1.msra.mxu0 0.0
  %103 = vmatprep.subr.mxu0 0.0
  %104 = vmatpush1.msra.mxu0 0.0
  %105 = vmatprep.subr.mxu0 0.0
  %106 = vmatpush1.msra.mxu0 0.0
  %107 = vmatprep.subr.mxu0 0.0
  %108 = vmatpush1.msra.mxu0 0.0
  %109 = vmatprep.mubr.f32.mxu0 0.0
  %110 = vmatmul.mubr.f32.gmra.mrb[0].mxu0 %v37
  %v111 = vpop.f32.mrb[0].mxu0
  %v112 = vadd.f32 0.0, %v111
  %v113 = vpop.f32.mrb[0].mxu0
  %114 = vmatprep.mubr.f32.mxu0 0.0
  %115 = vmatmul.mubr.f32.gmra.mrb[0].mxu0 %v40
  %v116 = vpop.f32.mrb[0].mxu0
  %v117 = vadd.f32 0.0, %v116
  %v118 = vpop.f32.mrb[0].mxu0
  %119 = vmatprep.mubr.f32.mxu0 0.0
  %120 = vmatmul.mubr.f32.gmra.mrb[0].mxu0 %v43
  %v121 = vpop.f32.mrb[0].mxu0
  %v122 = vadd.f32 0.0, %v121
  %v123 = vpop.f32.mrb[0].mxu0
  %124 = vdwg.mxu0
  %125 = vst [vmem:[#allocation5] sm:$0x1] %v122
  %126 = vst [vmem:[#allocation6 - $0x1] sm:$0x2] %v122
  %v127 = vtanh.pop %v112
  %v128 = vtanh.pop %v117
  %129 = vst [vmem:[#allocation2] sm:$0xff] %v127
  %130 = vst [vmem:[#allocation2 + $0x8] sm:$0xff] %v128
  %v131 = vld [vmem:[#allocation3 + $0x1] sm:$0x1]
  %132 = vst [vmem:[#allocation2 + $0x10] sm:$0x1] %v131
  %v133 = vld [vmem:[#allocation4 + $0x1] sm:$0x1]
  %134 = vst [vmem:[#allocation2 + $0x11] sm:$0x1] %v133
  %v135 = vld [vmem:[#allocation2] sm:$0xff]
  %v136 = vld [vmem:[#allocation2 + $0x8] sm:$0xff]
  %v137 = vld [vmem:[#allocation2 + $0x10] sm:$0xff]
  %138 = vmatprep.subr.mxu0 0.0
  %139 = vmatpush1.msra.mxu0 %v135
  %140 = vmatprep.subr.mxu0 0.0
  %141 = vmatpush1.msra.mxu0 %v136
  %142 = vmatprep.subr.mxu0 0.0
  %143 = vmatpush1.msra.mxu0 %v137
  %144 = vmatprep.subr.mxu0 0.0
  %145 = vmatpush1.msra.mxu0 0.0
  %146 = vmatprep.subr.mxu0 0.0
  %147 = vmatpush1.msra.mxu0 0.0
  %148 = vmatprep.subr.mxu0 0.0
  %149 = vmatpush1.msra.mxu0 0.0
  %150 = vmatprep.subr.mxu0 0.0
  %151 = vmatpush1.msra.mxu0 0.0
  %152 = vmatprep.subr.mxu0 0.0
  %153 = vmatpush1.msra.mxu0 0.0
  %154 = vmatprep.subr.mxu0 0.0
  %155 = vmatpush1.msra.mxu0 0.0
  %156 = vmatprep.subr.mxu0 0.0
  %157 = vmatpush1.msra.mxu0 0.0
  %158 = vmatprep.subr.mxu0 0.0
  %159 = vmatpush1.msra.mxu0 0.0
  %160 = vmatprep.subr.mxu0 0.0
  %161 = vmatpush1.msra.mxu0 0.0
  %162 = vmatprep.subr.mxu0 0.0
  %163 = vmatpush1.msra.mxu0 0.0
  %164 = vmatprep.subr.mxu0 0.0
  %165 = vmatpush1.msra.mxu0 0.0
  %166 = vmatprep.subr.mxu0 0.0
  %167 = vmatpush1.msra.mxu0 0.0
  %168 = vmatprep.subr.mxu0 0.0
  %169 = vmatpush1.msra.mxu0 0.0
  %170 = vmatprep.subr.mxu0 0.0
  %171 = vmatpush1.msra.mxu0 0.0
  %172 = vmatprep.subr.mxu0 0.0
  %173 = vmatpush1.msra.mxu0 0.0
  %174 = vmatprep.subr.mxu0 0.0
  %175 = vmatpush1.msra.mxu0 0.0
  %176 = vmatprep.subr.mxu0 0.0
  %177 = vmatpush1.msra.mxu0 0.0
  %178 = vmatprep.subr.mxu0 0.0
  %179 = vmatpush1.msra.mxu0 0.0
  %180 = vmatprep.subr.mxu0 0.0
  %181 = vmatpush1.msra.mxu0 0.0
  %182 = vmatprep.subr.mxu0 0.0
  %183 = vmatpush1.msra.mxu0 0.0
  %184 = vmatprep.subr.mxu0 0.0
  %185 = vmatpush1.msra.mxu0 0.0
  %186 = vmatprep.subr.mxu0 0.0
  %187 = vmatpush1.msra.mxu0 0.0
  %188 = vmatprep.subr.mxu0 0.0
  %189 = vmatpush1.msra.mxu0 0.0
  %190 = vmatprep.subr.mxu0 0.0
  %191 = vmatpush1.msra.mxu0 0.0
  %192 = vmatprep.subr.mxu0 0.0
  %193 = vmatpush1.msra.mxu0 0.0
  %194 = vmatprep.subr.mxu0 0.0
  %195 = vmatpush1.msra.mxu0 0.0
  %196 = vmatprep.subr.mxu0 0.0
  %197 = vmatpush1.msra.mxu0 0.0
  %198 = vmatprep.subr.mxu0 0.0
  %199 = vmatpush1.msra.mxu0 0.0
  %200 = vmatprep.subr.mxu0 0.0
  %201 = vmatpush1.msra.mxu0 0.0
  %202 = vmatprep.mubr.f32.mxu0 0.0
  %203 = vmatmul.mubr.f32.gmra.mrb[0].mxu0 %v37
  %v204 = vpop.f32.mrb[0].mxu0
  %v205 = vadd.f32 0.0, %v204
  %v206 = vpop.f32.mrb[0].mxu0
  %207 = vmatprep.mubr.f32.mxu0 0.0
  %208 = vmatmul.mubr.f32.gmra.mrb[0].mxu0 %v40
  %v209 = vpop.f32.mrb[0].mxu0
  %v210 = vadd.f32 0.0, %v209
  %v211 = vpop.f32.mrb[0].mxu0
  %212 = vmatprep.mubr.f32.mxu0 0.0
  %213 = vmatmul.mubr.f32.gmra.mrb[0].mxu0 %v43
  %v214 = vpop.f32.mrb[0].mxu0
  %v215 = vadd.f32 0.0, %v214
  %v216 = vpop.f32.mrb[0].mxu0
  %217 = vdwg.mxu0
  %218 = vst [vmem:[#allocation5 + $0x1] sm:$0x1] %v215
  %219 = vst [vmem:[#allocation6] sm:$0x2] %v215
  %v220 = vtanh.pop %v205
  %v221 = vtanh.pop %v210
  %222 = vst [vmem:[#allocation2] sm:$0xff] %v220
  %223 = vst [vmem:[#allocation2 + $0x8] sm:$0xff] %v221
  %v224 = vld [vmem:[#allocation3 + $0x2] sm:$0x1]
  %225 = vst [vmem:[#allocation2 + $0x10] sm:$0x1] %v224
  %v226 = vld [vmem:[#allocation4 + $0x2] sm:$0x1]
  %227 = vst [vmem:[#allocation2 + $0x11] sm:$0x1] %v226
  %v228 = vld [vmem:[#allocation2] sm:$0xff]
  %v229 = vld [vmem:[#allocation2 + $0x8] sm:$0xff]
  %v230 = vld [vmem:[#allocation2 + $0x10] sm:$0xff]
  %231 = vmatprep.subr.mxu0 0.0
  %232 = vmatpush1.msra.mxu0 %v228
  %233 = vmatprep.subr.mxu0 0.0
  %234 = vmatpush1.msra.mxu0 %v229
  %235 = vmatprep.subr.mxu0 0.0
  %236 = vmatpush1.msra.mxu0 %v230
  %237 = vmatprep.subr.mxu0 0.0
  %238 = vmatpush1.msra.mxu0 0.0
  %239 = vmatprep.subr.mxu0 0.0
  %240 = vmatpush1.msra.mxu0 0.0
  %241 = vmatprep.subr.mxu0 0.0
  %242 = vmatpush1.msra.mxu0 0.0
  %243 = vmatprep.subr.mxu0 0.0
  %244 = vmatpush1.msra.mxu0 0.0
  %245 = vmatprep.subr.mxu0 0.0
  %246 = vmatpush1.msra.mxu0 0.0
  %247 = vmatprep.subr.mxu0 0.0
  %248 = vmatpush1.msra.mxu0 0.0
  %249 = vmatprep.subr.mxu0 0.0
  %250 = vmatpush1.msra.mxu0 0.0
  %251 = vmatprep.subr.mxu0 0.0
  %252 = vmatpush1.msra.mxu0 0.0
  %253 = vmatprep.subr.mxu0 0.0
  %254 = vmatpush1.msra.mxu0 0.0
  %255 = vmatprep.subr.mxu0 0.0
  %256 = vmatpush1.msra.mxu0 0.0
  %257 = vmatprep.subr.mxu0 0.0
  %258 = vmatpush1.msra.mxu0 0.0
  %259 = vmatprep.subr.mxu0 0.0
  %260 = vmatpush1.msra.mxu0 0.0
  %261 = vmatprep.subr.mxu0 0.0
  %262 = vmatpush1.msra.mxu0 0.0
  %263 = vmatprep.subr.mxu0 0.0
  %264 = vmatpush1.msra.mxu0 0.0
  %265 = vmatprep.subr.mxu0 0.0
  %266 = vmatpush1.msra.mxu0 0.0
  %267 = vmatprep.subr.mxu0 0.0
  %268 = vmatpush1.msra.mxu0 0.0
  %269 = vmatprep.subr.mxu0 0.0
  %270 = vmatpush1.msra.mxu0 0.0
  %271 = vmatprep.subr.mxu0 0.0
  %272 = vmatpush1.msra.mxu0 0.0
  %273 = vmatprep.subr.mxu0 0.0
  %274 = vmatpush1.msra.mxu0 0.0
  %275 = vmatprep.subr.mxu0 0.0
  %276 = vmatpush1.msra.mxu0 0.0
  %277 = vmatprep.subr.mxu0 0.0
  %278 = vmatpush1.msra.mxu0 0.0
  %279 = vmatprep.subr.mxu0 0.0
  %280 = vmatpush1.msra.mxu0 0.0
  %281 = vmatprep.subr.mxu0 0.0
  %282 = vmatpush1.msra.mxu0 0.0
  %283 = vmatprep.subr.mxu0 0.0
  %284 = vmatpush1.msra.mxu0 0.0
  %285 = vmatprep.subr.mxu0 0.0
  %286 = vmatpush1.msra.mxu0 0.0
  %287 = vmatprep.subr.mxu0 0.0
  %288 = vmatpush1.msra.mxu0 0.0
  %289 = vmatprep.subr.mxu0 0.0
  %290 = vmatpush1.msra.mxu0 0.0
  %291 = vmatprep.subr.mxu0 0.0
  %292 = vmatpush1.msra.mxu0 0.0
  %293 = vmatprep.subr.mxu0 0.0
  %294 = vmatpush1.msra.mxu0 0.0
  %295 = vmatprep.mubr.f32.mxu0 0.0
  %296 = vmatmul.mubr.f32.gmra.mrb[0].mxu0 %v37
  %v297 = vpop.f32.mrb[0].mxu0
  %v298 = vadd.f32 0.0, %v297
  %v299 = vpop.f32.mrb[0].mxu0
  %300 = vmatprep.mubr.f32.mxu0 0.0
  %301 = vmatmul.mubr.f32.gmra.mrb[0].mxu0 %v40
  %v302 = vpop.f32.mrb[0].mxu0
  %v303 = vadd.f32 0.0, %v302
  %v304 = vpop.f32.mrb[0].mxu0
  %305 = vmatprep.mubr.f32.mxu0 0.0
  %306 = vmatmul.mubr.f32.gmra.mrb[0].mxu0 %v43
  %v307 = vpop.f32.mrb[0].mxu0
  %v308 = vadd.f32 0.0, %v307
  %v309 = vpop.f32.mrb[0].mxu0
  %310 = vdwg.mxu0
  %311 = vst [vmem:[#allocation5 + $0x2] sm:$0x1] %v308
  %312 = vst [vmem:[#allocation6 + $0x1] sm:$0x2] %v308
  %v313 = vtanh.pop %v298
  %v314 = vtanh.pop %v303
  %315 = vst [vmem:[#allocation2] sm:$0xff] %v313
  %316 = vst [vmem:[#allocation2 + $0x8] sm:$0xff] %v314
  %v317 = vld [vmem:[#allocation3 + $0x3] sm:$0x1]
  %318 = vst [vmem:[#allocation2 + $0x10] sm:$0x1] %v317
  %v319 = vld [vmem:[#allocation4 + $0x3] sm:$0x1]
  %320 = vst [vmem:[#allocation2 + $0x11] sm:$0x1] %v319
  %v321 = vld [vmem:[#allocation2] sm:$0xff]
  %v322 = vld [vmem:[#allocation2 + $0x8] sm:$0xff]
  %v323 = vld [vmem:[#allocation2 + $0x10] sm:$0xff]
  %324 = vmatprep.subr.mxu0 0.0
  %325 = vmatpush1.msra.mxu0 %v321
  %326 = vmatprep.subr.mxu0 0.0
  %327 = vmatpush1.msra.mxu0 %v322
  %328 = vmatprep.subr.mxu0 0.0
  %329 = vmatpush1.msra.mxu0 %v323
  %330 = vmatprep.subr.mxu0 0.0
  %331 = vmatpush1.msra.mxu0 0.0
  %332 = vmatprep.subr.mxu0 0.0
  %333 = vmatpush1.msra.mxu0 0.0
  %334 = vmatprep.subr.mxu0 0.0
  %335 = vmatpush1.msra.mxu0 0.0
  %336 = vmatprep.subr.mxu0 0.0
  %337 = vmatpush1.msra.mxu0 0.0
  %338 = vmatprep.subr.mxu0 0.0
  %339 = vmatpush1.msra.mxu0 0.0
  %340 = vmatprep.subr.mxu0 0.0
  %341 = vmatpush1.msra.mxu0 0.0
  %342 = vmatprep.subr.mxu0 0.0
  %343 = vmatpush1.msra.mxu0 0.0
  %344 = vmatprep.subr.mxu0 0.0
  %345 = vmatpush1.msra.mxu0 0.0
  %346 = vmatprep.subr.mxu0 0.0
  %347 = vmatpush1.msra.mxu0 0.0
  %348 = vmatprep.subr.mxu0 0.0
  %349 = vmatpush1.msra.mxu0 0.0
  %350 = vmatprep.subr.mxu0 0.0
  %351 = vmatpush1.msra.mxu0 0.0
  %352 = vmatprep.subr.mxu0 0.0
  %353 = vmatpush1.msra.mxu0 0.0
  %354 = vmatprep.subr.mxu0 0.0
  %355 = vmatpush1.msra.mxu0 0.0
  %356 = vmatprep.subr.mxu0 0.0
  %357 = vmatpush1.msra.mxu0 0.0
  %358 = vmatprep.subr.mxu0 0.0
  %359 = vmatpush1.msra.mxu0 0.0
  %360 = vmatprep.subr.mxu0 0.0
  %361 = vmatpush1.msra.mxu0 0.0
  %362 = vmatprep.subr.mxu0 0.0
  %363 = vmatpush1.msra.mxu0 0.0
  %364 = vmatprep.subr.mxu0 0.0
  %365 = vmatpush1.msra.mxu0 0.0
  %366 = vmatprep.subr.mxu0 0.0
  %367 = vmatpush1.msra.mxu0 0.0
  %368 = vmatprep.subr.mxu0 0.0
  %369 = vmatpush1.msra.mxu0 0.0
  %370 = vmatprep.subr.mxu0 0.0
  %371 = vmatpush1.msra.mxu0 0.0
  %372 = vmatprep.subr.mxu0 0.0
  %373 = vmatpush1.msra.mxu0 0.0
  %374 = vmatprep.subr.mxu0 0.0
  %375 = vmatpush1.msra.mxu0 0.0
  %376 = vmatprep.subr.mxu0 0.0
  %377 = vmatpush1.msra.mxu0 0.0
  %378 = vmatprep.subr.mxu0 0.0
  %379 = vmatpush1.msra.mxu0 0.0
  %380 = vmatprep.subr.mxu0 0.0
  %381 = vmatpush1.msra.mxu0 0.0
  %382 = vmatprep.subr.mxu0 0.0
  %383 = vmatpush1.msra.mxu0 0.0
  %384 = vmatprep.subr.mxu0 0.0
  %385 = vmatpush1.msra.mxu0 0.0
  %386 = vmatprep.subr.mxu0 0.0
  %387 = vmatpush1.msra.mxu0 0.0
  %388 = vmatprep.mubr.f32.mxu0 0.0
  %389 = vmatmul.mubr.f32.gmra.mrb[0].mxu0 %v37
  %v390 = vpop.f32.mrb[0].mxu0
  %v391 = vadd.f32 0.0, %v390
  %v392 = vpop.f32.mrb[0].mxu0
  %393 = vmatprep.mubr.f32.mxu0 0.0
  %394 = vmatmul.mubr.f32.gmra.mrb[0].mxu0 %v40
  %v395 = vpop.f32.mrb[0].mxu0
  %v396 = vadd.f32 0.0, %v395
  %v397 = vpop.f32.mrb[0].mxu0
  %398 = vmatprep.mubr.f32.mxu0 0.0
  %399 = vmatmul.mubr.f32.gmra.mrb[0].mxu0 %v43
  %v400 = vpop.f32.mrb[0].mxu0
  %v401 = vadd.f32 0.0, %v400
  %v402 = vpop.f32.mrb[0].mxu0
  %403 = vdwg.mxu0
  %404 = vst [vmem:[#allocation5 + $0x3] sm:$0x1] %v401
  %405 = vst [vmem:[#allocation6 + $0x2] sm:$0x2] %v401
  %v406 = vtanh.pop %v391
  %v407 = vtanh.pop %v396
  %408 = vst [vmem:[#allocation2] sm:$0xff] %v406
  %409 = vst [vmem:[#allocation2 + $0x8] sm:$0xff] %v407
  %v410 = vld [vmem:[#allocation3 + $0x4] sm:$0x1]
  %411 = vst [vmem:[#allocation2 + $0x10] sm:$0x1] %v410
  %v412 = vld [vmem:[#allocation4 + $0x4] sm:$0x1]
  %413 = vst [vmem:[#allocation2 + $0x11] sm:$0x1] %v412
  %v414 = vld [vmem:[#allocation2] sm:$0xff]
  %v415 = vld [vmem:[#allocation2 + $0x8] sm:$0xff]
  %v416 = vld [vmem:[#allocation2 + $0x10] sm:$0xff]
  %417 = vmatprep.subr.mxu0 0.0
  %418 = vmatpush1.msra.mxu0 %v414
  %419 = vmatprep.subr.mxu0 0.0
  %420 = vmatpush1.msra.mxu0 %v415
  %421 = vmatprep.subr.mxu0 0.0
  %422 = vmatpush1.msra.mxu0 %v416
  %423 = vmatprep.subr.mxu0 0.0
  %424 = vmatpush1.msra.mxu0 0.0
  %425 = vmatprep.subr.mxu0 0.0
  %426 = vmatpush1.msra.mxu0 0.0
  %427 = vmatprep.subr.mxu0 0.0
  %428 = vmatpush1.msra.mxu0 0.0
  %429 = vmatprep.subr.mxu0 0.0
  %430 = vmatpush1.msra.mxu0 0.0
  %431 = vmatprep.subr.mxu0 0.0
  %432 = vmatpush1.msra.mxu0 0.0
  %433 = vmatprep.subr.mxu0 0.0
  %434 = vmatpush1.msra.mxu0 0.0
  %435 = vmatprep.subr.mxu0 0.0
  %436 = vmatpush1.msra.mxu0 0.0
  %437 = vmatprep.subr.mxu0 0.0
  %438 = vmatpush1.msra.mxu0 0.0
  %439 = vmatprep.subr.mxu0 0.0
  %440 = vmatpush1.msra.mxu0 0.0
  %441 = vmatprep.subr.mxu0 0.0
  %442 = vmatpush1.msra.mxu0 0.0
  %443 = vmatprep.subr.mxu0 0.0
  %444 = vmatpush1.msra.mxu0 0.0
  %445 = vmatprep.subr.mxu0 0.0
  %446 = vmatpush1.msra.mxu0 0.0
  %447 = vmatprep.subr.mxu0 0.0
  %448 = vmatpush1.msra.mxu0 0.0
  %449 = vmatprep.subr.mxu0 0.0
  %450 = vmatpush1.msra.mxu0 0.0
  %451 = vmatprep.subr.mxu0 0.0
  %452 = vmatpush1.msra.mxu0 0.0
  %453 = vmatprep.subr.mxu0 0.0
  %454 = vmatpush1.msra.mxu0 0.0
  %455 = vmatprep.subr.mxu0 0.0
  %456 = vmatpush1.msra.mxu0 0.0
  %457 = vmatprep.subr.mxu0 0.0
  %458 = vmatpush1.msra.mxu0 0.0
  %459 = vmatprep.subr.mxu0 0.0
  %460 = vmatpush1.msra.mxu0 0.0
  %461 = vmatprep.subr.mxu0 0.0
  %462 = vmatpush1.msra.mxu0 0.0
  %463 = vmatprep.subr.mxu0 0.0
  %464 = vmatpush1.msra.mxu0 0.0
  %465 = vmatprep.subr.mxu0 0.0
  %466 = vmatpush1.msra.mxu0 0.0
  %467 = vmatprep.subr.mxu0 0.0
  %468 = vmatpush1.msra.mxu0 0.0
  %469 = vmatprep.subr.mxu0 0.0
  %470 = vmatpush1.msra.mxu0 0.0
  %471 = vmatprep.subr.mxu0 0.0
  %472 = vmatpush1.msra.mxu0 0.0
  %473 = vmatprep.subr.mxu0 0.0
  %474 = vmatpush1.msra.mxu0 0.0
  %475 = vmatprep.subr.mxu0 0.0
  %476 = vmatpush1.msra.mxu0 0.0
  %477 = vmatprep.subr.mxu0 0.0
  %478 = vmatpush1.msra.mxu0 0.0
  %479 = vmatprep.subr.mxu0 0.0
  %480 = vmatpush1.msra.mxu0 0.0
  %481 = vmatprep.mubr.f32.mxu0 0.0
  %482 = vmatmul.mubr.f32.gmra.mrb[0].mxu0 %v37
  %v483 = vpop.f32.mrb[0].mxu0
  %v484 = vadd.f32 0.0, %v483
  %v485 = vpop.f32.mrb[0].mxu0
  %486 = vmatprep.mubr.f32.mxu0 0.0
  %487 = vmatmul.mubr.f32.gmra.mrb[0].mxu0 %v40
  %v488 = vpop.f32.mrb[0].mxu0
  %v489 = vadd.f32 0.0, %v488
  %v490 = vpop.f32.mrb[0].mxu0
  %491 = vmatprep.mubr.f32.mxu0 0.0
  %492 = vmatmul.mubr.f32.gmra.mrb[0].mxu0 %v43
  %v493 = vpop.f32.mrb[0].mxu0
  %v494 = vadd.f32 0.0, %v493
  %v495 = vpop.f32.mrb[0].mxu0
  %496 = vdwg.mxu0
  %497 = vst [vmem:[#allocation5 + $0x4] sm:$0x1] %v494
  %498 = vst [vmem:[#allocation6 + $0x3] sm:$0x2] %v494
  %v499 = vtanh.pop %v484
  %v500 = vtanh.pop %v489
  %501 = vst [vmem:[#allocation2] sm:$0xff] %v499
  %502 = vst [vmem:[#allocation2 + $0x8] sm:$0xff] %v500
  %v503 = vld [vmem:[#allocation3 + $0x5] sm:$0x1]
  %504 = vst [vmem:[#allocation2 + $0x10] sm:$0x1] %v503
  %v505 = vld [vmem:[#allocation4 + $0x5] sm:$0x1]
  %506 = vst [vmem:[#allocation2 + $0x11] sm:$0x1] %v505
  %v507 = vld [vmem:[#allocation2] sm:$0xff]
  %v508 = vld [vmem:[#allocation2 + $0x8] sm:$0xff]
  %v509 = vld [vmem:[#allocation2 + $0x10] sm:$0xff]
  %510 = vmatprep.subr.mxu0 0.0
  %511 = vmatpush1.msra.mxu0 %v507
  %512 = vmatprep.subr.mxu0 0.0
  %513 = vmatpush1.msra.mxu0 %v508
  %514 = vmatprep.subr.mxu0 0.0
  %515 = vmatpush1.msra.mxu0 %v509
  %516 = vmatprep.subr.mxu0 0.0
  %517 = vmatpush1.msra.mxu0 0.0
  %518 = vmatprep.subr.mxu0 0.0
  %519 = vmatpush1.msra.mxu0 0.0
  %520 = vmatprep.subr.mxu0 0.0
  %521 = vmatpush1.msra.mxu0 0.0
  %522 = vmatprep.subr.mxu0 0.0
  %523 = vmatpush1.msra.mxu0 0.0
  %524 = vmatprep.subr.mxu0 0.0
  %525 = vmatpush1.msra.mxu0 0.0
  %526 = vmatprep.subr.mxu0 0.0
  %527 = vmatpush1.msra.mxu0 0.0
  %528 = vmatprep.subr.mxu0 0.0
  %529 = vmatpush1.msra.mxu0 0.0
  %530 = vmatprep.subr.mxu0 0.0
  %531 = vmatpush1.msra.mxu0 0.0
  %532 = vmatprep.subr.mxu0 0.0
  %533 = vmatpush1.msra.mxu0 0.0
  %534 = vmatprep.subr.mxu0 0.0
  %535 = vmatpush1.msra.mxu0 0.0
  %536 = vmatprep.subr.mxu0 0.0
  %537 = vmatpush1.msra.mxu0 0.0
  %538 = vmatprep.subr.mxu0 0.0
  %539 = vmatpush1.msra.mxu0 0.0
  %540 = vmatprep.subr.mxu0 0.0
  %541 = vmatpush1.msra.mxu0 0.0
  %542 = vmatprep.subr.mxu0 0.0
  %543 = vmatpush1.msra.mxu0 0.0
  %544 = vmatprep.subr.mxu0 0.0
  %545 = vmatpush1.msra.mxu0 0.0
  %546 = vmatprep.subr.mxu0 0.0
  %547 = vmatpush1.msra.mxu0 0.0
  %548 = vmatprep.subr.mxu0 0.0
  %549 = vmatpush1.msra.mxu0 0.0
  %550 = vmatprep.subr.mxu0 0.0
  %551 = vmatpush1.msra.mxu0 0.0
  %552 = vmatprep.subr.mxu0 0.0
  %553 = vmatpush1.msra.mxu0 0.0
  %554 = vmatprep.subr.mxu0 0.0
  %555 = vmatpush1.msra.mxu0 0.0
  %556 = vmatprep.subr.mxu0 0.0
  %557 = vmatpush1.msra.mxu0 0.0
  %558 = vmatprep.subr.mxu0 0.0
  %559 = vmatpush1.msra.mxu0 0.0
  %560 = vmatprep.subr.mxu0 0.0
  %561 = vmatpush1.msra.mxu0 0.0
  %562 = vmatprep.subr.mxu0 0.0
  %563 = vmatpush1.msra.mxu0 0.0
  %564 = vmatprep.subr.mxu0 0.0
  %565 = vmatpush1.msra.mxu0 0.0
  %566 = vmatprep.subr.mxu0 0.0
  %567 = vmatpush1.msra.mxu0 0.0
  %568 = vmatprep.subr.mxu0 0.0
  %569 = vmatpush1.msra.mxu0 0.0
  %570 = vmatprep.subr.mxu0 0.0
  %571 = vmatpush1.msra.mxu0 0.0
  %572 = vmatprep.subr.mxu0 0.0
  %573 = vmatpush1.msra.mxu0 0.0
  %574 = vmatprep.mubr.f32.mxu0 0.0
  %575 = vmatmul.mubr.f32.gmra.mrb[0].mxu0 %v37
  %v576 = vpop.f32.mrb[0].mxu0
  %v577 = vadd.f32 0.0, %v576
  %v578 = vpop.f32.mrb[0].mxu0
  %579 = vmatprep.mubr.f32.mxu0 0.0
  %580 = vmatmul.mubr.f32.gmra.mrb[0].mxu0 %v40
  %v581 = vpop.f32.mrb[0].mxu0
  %v582 = vadd.f32 0.0, %v581
  %v583 = vpop.f32.mrb[0].mxu0
  %584 = vmatprep.mubr.f32.mxu0 0.0
  %585 = vmatmul.mubr.f32.gmra.mrb[0].mxu0 %v43
  %v586 = vpop.f32.mrb[0].mxu0
  %v587 = vadd.f32 0.0, %v586
  %v588 = vpop.f32.mrb[0].mxu0
  %589 = vdwg.mxu0
  %590 = vst [vmem:[#allocation5 + $0x5] sm:$0x1] %v587
  %591 = vst [vmem:[#allocation6 + $0x4] sm:$0x2] %v587
  %v592 = vtanh.pop %v577
  %v593 = vtanh.pop %v582
  %594 = vst [vmem:[#allocation2] sm:$0xff] %v592
  %595 = vst [vmem:[#allocation2 + $0x8] sm:$0xff] %v593
  %v596 = vld [vmem:[#allocation3 + $0x6] sm:$0x1]
  %597 = vst [vmem:[#allocation2 + $0x10] sm:$0x1] %v596
  %v598 = vld [vmem:[#allocation4 + $0x6] sm:$0x1]
  %599 = vst [vmem:[#allocation2 + $0x11] sm:$0x1] %v598
  %v600 = vld [vmem:[#allocation2] sm:$0xff]
  %v601 = vld [vmem:[#allocation2 + $0x8] sm:$0xff]
  %v602 = vld [vmem:[#allocation2 + $0x10] sm:$0xff]
  %603 = vmatprep.subr.mxu0 0.0
  %604 = vmatpush1.msra.mxu0 %v600
  %605 = vmatprep.subr.mxu0 0.0
  %606 = vmatpush1.msra.mxu0 %v601
  %607 = vmatprep.subr.mxu0 0.0
  %608 = vmatpush1.msra.mxu0 %v602
  %609 = vmatprep.subr.mxu0 0.0
  %610 = vmatpush1.msra.mxu0 0.0
  %611 = vmatprep.subr.mxu0 0.0
  %612 = vmatpush1.msra.mxu0 0.0
  %613 = vmatprep.subr.mxu0 0.0
  %614 = vmatpush1.msra.mxu0 0.0
  %615 = vmatprep.subr.mxu0 0.0
  %616 = vmatpush1.msra.mxu0 0.0
  %617 = vmatprep.subr.mxu0 0.0
  %618 = vmatpush1.msra.mxu0 0.0
  %619 = vmatprep.subr.mxu0 0.0
  %620 = vmatpush1.msra.mxu0 0.0
  %621 = vmatprep.subr.mxu0 0.0
  %622 = vmatpush1.msra.mxu0 0.0
  %623 = vmatprep.subr.mxu0 0.0
  %624 = vmatpush1.msra.mxu0 0.0
  %625 = vmatprep.subr.mxu0 0.0
  %626 = vmatpush1.msra.mxu0 0.0
  %627 = vmatprep.subr.mxu0 0.0
  %628 = vmatpush1.msra.mxu0 0.0
  %629 = vmatprep.subr.mxu0 0.0
  %630 = vmatpush1.msra.mxu0 0.0
  %631 = vmatprep.subr.mxu0 0.0
  %632 = vmatpush1.msra.mxu0 0.0
  %633 = vmatprep.subr.mxu0 0.0
  %634 = vmatpush1.msra.mxu0 0.0
  %635 = vmatprep.subr.mxu0 0.0
  %636 = vmatpush1.msra.mxu0 0.0
  %637 = vmatprep.subr.mxu0 0.0
  %638 = vmatpush1.msra.mxu0 0.0
  %639 = vmatprep.subr.mxu0 0.0
  %640 = vmatpush1.msra.mxu0 0.0
  %641 = vmatprep.subr.mxu0 0.0
  %642 = vmatpush1.msra.mxu0 0.0
  %643 = vmatprep.subr.mxu0 0.0
  %644 = vmatpush1.msra.mxu0 0.0
  %645 = vmatprep.subr.mxu0 0.0
  %646 = vmatpush1.msra.mxu0 0.0
  %647 = vmatprep.subr.mxu0 0.0
  %648 = vmatpush1.msra.mxu0 0.0
  %649 = vmatprep.subr.mxu0 0.0
  %650 = vmatpush1.msra.mxu0 0.0
  %651 = vmatprep.subr.mxu0 0.0
  %652 = vmatpush1.msra.mxu0 0.0
  %653 = vmatprep.subr.mxu0 0.0
  %654 = vmatpush1.msra.mxu0 0.0
  %655 = vmatprep.subr.mxu0 0.0
  %656 = vmatpush1.msra.mxu0 0.0
  %657 = vmatprep.subr.mxu0 0.0
  %658 = vmatpush1.msra.mxu0 0.0
  %659 = vmatprep.subr.mxu0 0.0
  %660 = vmatpush1.msra.mxu0 0.0
  %661 = vmatprep.subr.mxu0 0.0
  %662 = vmatpush1.msra.mxu0 0.0
  %663 = vmatprep.subr.mxu0 0.0
  %664 = vmatpush1.msra.mxu0 0.0
  %665 = vmatprep.subr.mxu0 0.0
  %666 = vmatpush1.msra.mxu0 0.0
  %667 = vmatprep.mubr.f32.mxu0 0.0
  %668 = vmatmul.mubr.f32.gmra.mrb[0].mxu0 %v37
  %v669 = vpop.f32.mrb[0].mxu0
  %v670 = vadd.f32 0.0, %v669
  %v671 = vpop.f32.mrb[0].mxu0
  %672 = vmatprep.mubr.f32.mxu0 0.0
  %673 = vmatmul.mubr.f32.gmra.mrb[0].mxu0 %v40
  %v674 = vpop.f32.mrb[0].mxu0
  %v675 = vadd.f32 0.0, %v674
  %v676 = vpop.f32.mrb[0].mxu0
  %677 = vmatprep.mubr.f32.mxu0 0.0
  %678 = vmatmul.mubr.f32.gmra.mrb[0].mxu0 %v43
  %v679 = vpop.f32.mrb[0].mxu0
  %v680 = vadd.f32 0.0, %v679
  %v681 = vpop.f32.mrb[0].mxu0
  %682 = vdwg.mxu0
  %683 = vst [vmem:[#allocation5 + $0x6] sm:$0x1] %v680
  %684 = vst [vmem:[#allocation6 + $0x5] sm:$0x2] %v680
  %v685 = vtanh.pop %v670
  %v686 = vtanh.pop %v675
  %687 = vst [vmem:[#allocation2] sm:$0xff] %v685
  %688 = vst [vmem:[#allocation2 + $0x8] sm:$0xff] %v686
  %v689 = vld [vmem:[#allocation3 + $0x7] sm:$0x1]
  %690 = vst [vmem:[#allocation2 + $0x10] sm:$0x1] %v689
  %v691 = vld [vmem:[#allocation4 + $0x7] sm:$0x1]
  %692 = vst [vmem:[#allocation2 + $0x11] sm:$0x1] %v691
  %v693 = vld [vmem:[#allocation2] sm:$0xff]
  %v694 = vld [vmem:[#allocation2 + $0x8] sm:$0xff]
  %v695 = vld [vmem:[#allocation2 + $0x10] sm:$0xff]
  %696 = vmatprep.subr.mxu0 0.0
  %697 = vmatpush1.msra.mxu0 %v693
  %698 = vmatprep.subr.mxu0 0.0
  %699 = vmatpush1.msra.mxu0 %v694
  %700 = vmatprep.subr.mxu0 0.0
  %701 = vmatpush1.msra.mxu0 %v695
  %702 = vmatprep.subr.mxu0 0.0
  %703 = vmatpush1.msra.mxu0 0.0
  %704 = vmatprep.subr.mxu0 0.0
  %705 = vmatpush1.msra.mxu0 0.0
  %706 = vmatprep.subr.mxu0 0.0
  %707 = vmatpush1.msra.mxu0 0.0
  %708 = vmatprep.subr.mxu0 0.0
  %709 = vmatpush1.msra.mxu0 0.0
  %710 = vmatprep.subr.mxu0 0.0
  %711 = vmatpush1.msra.mxu0 0.0
  %712 = vmatprep.subr.mxu0 0.0
  %713 = vmatpush1.msra.mxu0 0.0
  %714 = vmatprep.subr.mxu0 0.0
  %715 = vmatpush1.msra.mxu0 0.0
  %716 = vmatprep.subr.mxu0 0.0
  %717 = vmatpush1.msra.mxu0 0.0
  %718 = vmatprep.subr.mxu0 0.0
  %719 = vmatpush1.msra.mxu0 0.0
  %720 = vmatprep.subr.mxu0 0.0
  %721 = vmatpush1.msra.mxu0 0.0
  %722 = vmatprep.subr.mxu0 0.0
  %723 = vmatpush1.msra.mxu0 0.0
  %724 = vmatprep.subr.mxu0 0.0
  %725 = vmatpush1.msra.mxu0 0.0
  %726 = vmatprep.subr.mxu0 0.0
  %727 = vmatpush1.msra.mxu0 0.0
  %728 = vmatprep.subr.mxu0 0.0
  %729 = vmatpush1.msra.mxu0 0.0
  %730 = vmatprep.subr.mxu0 0.0
  %731 = vmatpush1.msra.mxu0 0.0
  %732 = vmatprep.subr.mxu0 0.0
  %733 = vmatpush1.msra.mxu0 0.0
  %734 = vmatprep.subr.mxu0 0.0
  %735 = vmatpush1.msra.mxu0 0.0
  %736 = vmatprep.subr.mxu0 0.0
  %737 = vmatpush1.msra.mxu0 0.0
  %738 = vmatprep.subr.mxu0 0.0
  %739 = vmatpush1.msra.mxu0 0.0
  %740 = vmatprep.subr.mxu0 0.0
  %741 = vmatpush1.msra.mxu0 0.0
  %742 = vmatprep.subr.mxu0 0.0
  %743 = vmatpush1.msra.mxu0 0.0
  %744 = vmatprep.subr.mxu0 0.0
  %745 = vmatpush1.msra.mxu0 0.0
  %746 = vmatprep.subr.mxu0 0.0
  %747 = vmatpush1.msra.mxu0 0.0
  %748 = vmatprep.subr.mxu0 0.0
  %749 = vmatpush1.msra.mxu0 0.0
  %750 = vmatprep.subr.mxu0 0.0
  %751 = vmatpush1.msra.mxu0 0.0
  %752 = vmatprep.subr.mxu0 0.0
  %753 = vmatpush1.msra.mxu0 0.0
  %754 = vmatprep.subr.mxu0 0.0
  %755 = vmatpush1.msra.mxu0 0.0
  %756 = vmatprep.subr.mxu0 0.0
  %757 = vmatpush1.msra.mxu0 0.0
  %758 = vmatprep.subr.mxu0 0.0
  %759 = vmatpush1.msra.mxu0 0.0
  %760 = vmatprep.mubr.f32.mxu0 0.0
  %761 = vmatmul.mubr.f32.gmra.mrb[0].mxu0 %v37
  %v762 = vpop.f32.mrb[0].mxu0
  %v763 = vadd.f32 0.0, %v762
  %v764 = vpop.f32.mrb[0].mxu0
  %765 = vmatprep.mubr.f32.mxu0 0.0
  %766 = vmatmul.mubr.f32.gmra.mrb[0].mxu0 %v40
  %v767 = vpop.f32.mrb[0].mxu0
  %v768 = vadd.f32 0.0, %v767
  %v769 = vpop.f32.mrb[0].mxu0
  %770 = vmatprep.mubr.f32.mxu0 0.0
  %771 = vmatmul.mubr.f32.gmra.mrb[0].mxu0 %v43
  %v772 = vpop.f32.mrb[0].mxu0
  %v773 = vadd.f32 0.0, %v772
  %v774 = vpop.f32.mrb[0].mxu0
  %775 = vdwg.mxu0
  %776 = vst [vmem:[#allocation5 + $0x7] sm:$0x1] %v773
  %777 = vst [vmem:[#allocation6 + $0x6] sm:$0x2] %v773
  %v778 = vtanh.pop %v763
  %v779 = vtanh.pop %v768
  %780 = vst [vmem:[#allocation2] sm:$0xff] %v778
  %781 = vst [vmem:[#allocation2 + $0x8] sm:$0xff] %v779
  %v782 = vld [vmem:[#allocation5] sm:$0xff]
  %v783 = vld [vmem:[#allocation6] sm:$0xff]
  %v784 = vld [vmem:[%s0] sm:$0xff]
  %v785 = vmax.f32 %v784, 1e-08
  %v786 = vlog2.pop %v785
  %v787 = vmul.f32 %v786, 0.6931472
  %v788 = vsub.f32 %v787, %v782
  %v789 = vsub.f32 0.0, %v783
  %v790 = vmul.f32 %v789, 1.442695
  %v791 = vpow.pop %v790
  %v792 = vmul.f32 %v788, %v791
  %v793 = vsub.f32 0.0, %v787
  %v794 = vsub.f32 %v793, %v783
  %v795 = vsub.f32 %v794, 0.9189385
  %v796 = vmul.f32 %v792, 0.5
  %v797 = vmul.f32 %v796, %v792
  %v798 = vsub.f32 %v795, %v797
  %v799 = vmul.f32 %v792, 0.70710677
  %v800 = verf.f32.pop %v799
  %v801 = vadd.f32 %v800, 1.0
  %v802 = vmul.f32 %v801, 0.5
  %v803 = vsub.f32 1.0, %v802
  %v804 = vlog2.pop %v803
  %v805 = vmul.f32 %v804, 0.6931472
  %v806 = vld [vmem:[%s1] sm:$0xff]
  %vm807 = vcmp.gt.f32.partialorder %v806, 0.0
  %v808 = vlaneseq
  %v809 = vshrl.u32 %v808, 7
  %v810 = vsel %vm807, %v809, 4294967295
  %v811 = vrot.slane %v810, 4
  %vm812 = vcmp.gt.s32.totalorder %v810, %v811
  %v813 = vsel %vm812, %v810, %v811
  %v814 = vrot.slane %v813, 2
  %vm815 = vcmp.gt.s32.totalorder %v813, %v814
  %v816 = vsel %vm815, %v813, %v814
  %v817 = vrot.slane %v816, 1
  %vm818 = vcmp.gt.s32.totalorder %v816, %v817
  %v819 = vsel %vm818, %v816, %v817
  %vm820 = vcmp.eq.s32.totalorder %v809, %v819
  %vm821 = vmand %vm820, %vm807
  %v822 = vsel %vm807, %v798, 0.0
  %v823 = vsel %vm821, %v805, %v822
  %v824 = vrot.slane %v823, 4
  %v825 = vadd.f32 %v823, %v824
  %v826 = vrot.slane %v825, 2
  %v827 = vadd.f32 %v825, %v826
  %v828 = vrot.slane %v827, 1
  %v829 = vadd.f32 %v827, %v828
  %830 = vst [vmem:[%s3] sm:$0x1] %v829
  // Predicated region
  $region14: #{neural_tpp_log_likelihood.1} parent=0 // pred_check
    _
  $region15: #{neural_tpp_log_likelihood.1} parent=0 // pred_check_branch
    %832 = sbr.rel (0) target = $region17
  $region16: #{neural_tpp_log_likelihood.1} parent=0 // pred_region
    _
  $region17: #{neural_tpp_log_likelihood.1} parent=0 // pred_fallthru
    _
  // Predicated region
  $region18: #{neural_tpp_log_likelihood.1} parent=0 // pred_check
    _
  $region19: #{neural_tpp_log_likelihood.1} parent=0 // pred_check_branch
    %834 = sbr.rel (0) target = $region21
  $region20: #{neural_tpp_log_likelihood.1} parent=0 // pred_region
    _
  $region21: #{neural_tpp_log_likelihood.1} parent=0 // pred_fallthru
    _

</llo_original>
